<compile_context>
chip_gen: v7x
topology: tpu7x:2x2x1
jax: 0.10.0
libtpu: 0.0.40
codegen_flags: <defaults>
</compile_context>

<pallas_src>
import functools

import jax
import jax.numpy as jnp
from jax.experimental import pallas as pl
from jax.experimental.pallas import tpu as pltpu


_LANE = 128              # channel dims padded to the 128-lane vreg width
_TARGET_MM_ROWS = 256    # conv matmul M target: keeps the (M,128) f32 acc in
                         # vregs and matches the 256-tall v6e/v7x MXU
_TARGET_POOL_ROWS = 256  # pooling row-tile target
_TARGET_K = 256          # matmul K target (native v6e/v7x MXU depth)


def _vmem_limit():
    """Chip-aware scoped-VMEM budget: ~96 MiB on 128-MiB parts (v5e/v6e),
    conservative 40 MiB on 64-MiB parts (v7x) / unknown."""
    try:
        info = pltpu.get_tpu_info()
        cap = int(getattr(info, "vmem_capacity_bytes", 0) or 0)
    except Exception:
        cap = 0
    return (96 << 20) if cap >= (96 << 20) else (40 << 20)


_VMEM_LIMIT = _vmem_limit()


# ----------------------------------------------------------------------------
# small helpers
# ----------------------------------------------------------------------------
def _round_up(x, m):
    return ((x + m - 1) // m) * m


def _cparams(n_axes):
    return pltpu.CompilerParams(
        dimension_semantics=("parallel",) * n_axes,
        vmem_limit_bytes=_VMEM_LIMIT,
    )


def _phase_decomposition(kh, kw, stride):
    """Map each conv/pool tap (row-major (di,dj) = weight order) to
    (phase_idx, row_off, col_off) over the stride-decimated phase views of the
    padded input, so every in-kernel window load is a contiguous slice."""
    used, taps = [], []
    for di in range(kh):
        for dj in range(kw):
            phz = (di % stride, dj % stride)
            if phz not in used:
                used.append(phz)
            taps.append((used.index(phz), di // stride, dj // stride))
    return tuple(used), tuple(taps)


def _make_groups(n_taps, cin, target_k=_TARGET_K):
    """Group consecutive taps so each MXU matmul has K ~= target_k.
    Returns tuple of (k0_row_offset_into_flattened_weight, tap_indices)."""
    per = max(1, target_k // cin)
    groups, t = [], 0
    while t < n_taps:
        g = min(per, n_taps - t)
        groups.append((t * cin, tuple(range(t, t + g))))
        t += g
    return tuple(groups)


def _row_tile(ho, wo, target):
    """Largest tile_oh dividing ho with tile_oh*wo <= target and
    (tile_oh*wo) % 8 == 0 (sublane-dense stores); falls back to the full
    extent, which is always a legal block."""
    cap = max(1, target // max(wo, 1))
    for t in range(min(ho, cap), 0, -1):
        if ho % t == 0 and (t * wo) % 8 == 0:
            return t
    return ho


def _conv_tiling(n, ho, wo, target=_TARGET_MM_ROWS):
    """Returns (nb images folded into M, tile_oh rows per image per tile)."""
    hw = ho * wo
    if hw <= target:
        nb = min(n, max(1, target // hw))
        while n % nb:
            nb -= 1
        return nb, ho
    return 1, _row_tile(ho, wo, target)


# ----------------------------------------------------------------------------
# Pallas kernels
# ----------------------------------------------------------------------------
def _conv_kernel(*refs, n_phases, nb, taps, groups, tile_oh, wo, cin,
                 relu, has_residual):
    """One (image-block, output-row-tile) grid cell of a direct NHWC conv.

    refs = [phase_0..phase_{P-1}, w, b, (residual), out]
      phase_p : (nb, Hph, Wph, cin)  bf16 stride-phase views (VMEM resident)
      w       : (n_taps*cin, cout)   bf16, BN scale pre-folded (resident)
      b       : (1, cout)            f32 folded BN bias (resident)
      residual: (nb, tile_m, cout)   bf16 optional fused skip connection
      out     : (nb, tile_m, cout)   bf16 lane-dense output rows
    """
    ph = refs[:n_phases]
    w_ref = refs[n_phases]
    b_ref = refs[n_phases + 1]
    res_ref = refs[n_phases + 2] if has_residual else None
    o_ref = refs[-1]

    tile_m = tile_oh * wo
    m = nb * tile_m
    row0 = pl.multiple_of(pl.program_id(1) * tile_oh, tile_oh)

    def tap_chunk(t):
        p, ro, co = taps[t]
        win = ph[p][:, pl.ds(row0 + ro, tile_oh), pl.ds(co, wo), :]
        return win.reshape(m, cin)          # lane dim untouched; img folds into M

    # Register-resident f32 accumulation across K-groups (no per-tap VMEM
    # read-modify-write); ~2 taps per matmul so the MXU sees K=256.
    acc = None
    for k0, tids in groups:
        chunks = [tap_chunk(t) for t in tids]
        a = chunks[0] if len(chunks) == 1 else jnp.concatenate(chunks, axis=-1)
        part = jnp.dot(a, w_ref[pl.ds(k0, cin * len(tids)), :],
                       preferred_element_type=jnp.float32)
        acc = part if acc is None else acc + part

    out = acc + b_ref[...]                                # folded BN bias (f32)
    if has_residual:
        out = out + res_ref[...].reshape(m, -1).astype(jnp.float32)
    if relu:
        out = jnp.maximum(out, 0.0)
    o_ref[...] = out.reshape(nb, tile_m, -1).astype(o_ref.dtype)


def _maxpool_kernel(*refs, n_phases, taps, tile_oh, wo):
    ph = refs[:n_phases]
    o_ref = refs[-1]
    c = ph[0].shape[-1]
    row0 = pl.multiple_of(pl.program_id(1) * tile_oh, tile_oh)
    out = None
    for (p, ro, co) in taps:                 # bf16 max (exact; no f32 upcast)
        win = ph[p][:, pl.ds(row0 + ro, tile_oh), pl.ds(co, wo), :]
        out = win if out is None else jnp.maximum(out, win)
    o_ref[...] = out.reshape(1, tile_oh * wo, c).astype(o_ref.dtype)


def _gap_kernel(x_ref, o_ref, *, inv_hw):
    s = jnp.sum(x_ref[...].astype(jnp.float32), axis=1, keepdims=True)
    o_ref[...] = s * inv_hw


# ----------------------------------------------------------------------------
# cached pallas_call builders
# ----------------------------------------------------------------------------
@functools.lru_cache(maxsize=None)
def _build_conv_call(n, n_phases, hph, wph, cin, cout, taps, groups,
                     nb, tile_oh, ho, wo, relu, has_residual):
    tile_m = tile_oh * wo
    grid = (n // nb, ho // tile_oh)

    in_specs = [pl.BlockSpec((nb, hph, wph, cin), lambda b, t: (b, 0, 0, 0))
                for _ in range(n_phases)]                       # resident over t
    in_specs += [
        pl.BlockSpec((len(taps) * cin, cout), lambda b, t: (0, 0)),   # resident
        pl.BlockSpec((1, cout), lambda b, t: (0, 0)),                 # resident
    ]
    if has_residual:
        in_specs.append(pl.BlockSpec((nb, tile_m, cout), lambda b, t: (b, t, 0)))

    kernel = functools.partial(
        _conv_kernel, n_phases=n_phases, nb=nb, taps=taps, groups=groups,
        tile_oh=tile_oh, wo=wo, cin=cin, relu=relu, has_residual=has_residual)

    return pl.pallas_call(
        kernel,
        grid=grid,
        in_specs=in_specs,
        out_specs=pl.BlockSpec((nb, tile_m, cout), lambda b, t: (b, t, 0)),
        out_shape=jax.ShapeDtypeStruct((n, ho * wo, cout), jnp.bfloat16),
        compiler_params=_cparams(2),
    )


@functools.lru_cache(maxsize=None)
def _build_maxpool_call(n, n_phases, hph, wph, c, taps, tile_oh, ho, wo):
    tile_m = tile_oh * wo
    kernel = functools.partial(_maxpool_kernel, n_phases=n_phases, taps=taps,
                               tile_oh=tile_oh, wo=wo)
    in_specs = [pl.BlockSpec((1, hph, wph, c), lambda b, t: (b, 0, 0, 0))
                for _ in range(n_phases)]
    return pl.pallas_call(
        kernel,
        grid=(n, ho // tile_oh),
        in_specs=in_specs,
        out_specs=pl.BlockSpec((1, tile_m, c), lambda b, t: (b, t, 0)),
        out_shape=jax.ShapeDtypeStruct((n, ho * wo, c), jnp.bfloat16),
        compiler_params=_cparams(2),
    )


@functools.lru_cache(maxsize=None)
def _build_gap_call(n, hw, c):
    kernel = functools.partial(_gap_kernel, inv_hw=1.0 / float(hw))
    return pl.pallas_call(
        kernel,
        grid=(n,),
        in_specs=[pl.BlockSpec((1, hw, c), lambda b: (b, 0, 0))],
        out_specs=pl.BlockSpec((1, 1, c), lambda b: (b, 0, 0)),
        out_shape=jax.ShapeDtypeStruct((n, 1, c), jnp.float32),
        compiler_params=_cparams(1),
    )


# ----------------------------------------------------------------------------
# layer wrappers (XLA glue: zero-pad + stride-phase slices only)
# ----------------------------------------------------------------------------
def _padded_phases(x, kh, kw, stride, pad):
    """Zero-pad spatially and split into stride*stride contiguous phase views."""
    n, h, w, c = x.shape
    hp = _round_up(h + 2 * pad, stride)
    wp = _round_up(w + 2 * pad, stride)
    xp = jnp.pad(x, ((0, 0), (pad, hp - h - pad), (pad, wp - w - pad), (0, 0)))
    used, _ = _phase_decomposition(kh, kw, stride)
    if stride == 1:
        phases = [xp]
    else:
        phases = [xp[:, a::stride, b::stride, :] for (a, b) in used]
    return phases, hp // stride, wp // stride


def _direct_conv(phases, taps, w2d, b, ho, wo, cout, *, relu, residual):
    n = phases[0].shape[0]
    hph, wph, cin = phases[0].shape[1:]
    nb, tile_oh = _conv_tiling(n, ho, wo)
    groups = _make_groups(len(taps), cin)
    call = _build_conv_call(n, len(phases), hph, wph, cin, cout, tuple(taps),
                            groups, nb, tile_oh, ho, wo, relu,
                            residual is not None)
    operands = [*phases, w2d, b]
    if residual is not None:
        operands.append(residual.reshape(n, ho * wo, cout))   # free reshape
    out = call(*operands)
    return out.reshape(n, ho, wo, cout)                        # free reshape


def conv_bn_act(x, p, *, relu, residual=None):
    """Standard folded-BN conv (3x3 or 1x1, stride 1 or 2), NHWC bf16 I/O."""
    n, h, w_in, _ = x.shape
    kh, kw, s, pad = p["kh"], p["kw"], p["stride"], p["pad"]
    ho = (h + 2 * pad - kh) // s + 1
    wo = (w_in + 2 * pad - kw) // s + 1
    phases, hph, wph = _padded_phases(x, kh, kw, s, pad)
    _, taps = _phase_decomposition(kh, kw, s)
    return _direct_conv(phases, taps, p["w"], p["b"], ho, wo, p["cout_pad"],
                        relu=relu, residual=residual)


def stem_conv(x, p):
    """7x7/s2/p3 conv + folded BN + ReLU via space-to-depth + width-im2col so
    the kernel sees a 4-row-tap conv over 128 channels (two K=256 matmuls)."""
    n, h, w, c = x.shape
    ho = (h + 6 - 7) // 2 + 1
    wo = (w + 6 - 7) // 2 + 1
    xp = jnp.pad(x, ((0, 0), (3, 3 + (h % 2)), (3, 3 + (w % 2)), (0, 8 - c)))
    # stride-2 space-to-depth: channels 8 -> 32, spatial halved
    xs = jnp.concatenate(
        [xp[:, a::2, b::2, :] for (a, b) in ((0, 0), (0, 1), (1, 0), (1, 1))],
        axis=-1)
    # width-im2col over the 4 column taps: channels 32 -> 128 (one lane tile)
    xcol = jnp.concatenate([xs[:, :, s:s + wo, :] for s in range(4)], axis=-1)
    taps = tuple((0, r, 0) for r in range(4))
    return _direct_conv([xcol], taps, p["w"], p["b"], ho, wo, p["cout_pad"],
                        relu=True, residual=None)


def maxpool_3x3_s2(x):
    n, h, w_in, c = x.shape
    k, s, pad = 3, 2, 1
    ho = (h + 2 * pad - k) // s + 1
    wo = (w_in + 2 * pad - k) // s + 1
    # zero spatial padding is exact here: the input is post-ReLU (>= 0)
    phases, hph, wph = _padded_phases(x, k, k, s, pad)
    _, taps = _phase_decomposition(k, k, s)
    tile_oh = _row_tile(ho, wo, _TARGET_POOL_ROWS)
    call = _build_maxpool_call(n, len(phases), hph, wph, c, tuple(taps),
                               tile_oh, ho, wo)
    return call(*phases).reshape(n, ho, wo, c)


def global_avgpool(x):
    n, h, w_in, c = x.shape
    out = _build_gap_call(n, h * w_in, c)(x.reshape(n, h * w_in, c))
    return out.reshape(n, c)


# ----------------------------------------------------------------------------
# Synthetic (deterministic) ResNet-18-style params, BN folded + lane-padded
# ----------------------------------------------------------------------------
def _fold_bn(key, shape_w, cout, fan_in, eps=1e-5):
    kw_, kb, kg, km, kv = jax.random.split(key, 5)
    w = jax.random.normal(kw_, shape_w, jnp.float32) * (2.0 / fan_in) ** 0.5
    gamma = 1.0 + 0.1 * jax.random.normal(kg, (cout,), jnp.float32)
    beta = 0.1 * jax.random.normal(kb, (cout,), jnp.float32)
    mean = 0.1 * jax.random.normal(km, (cout,), jnp.float32)
    var = 1.0 + 0.1 * jax.random.uniform(kv, (cout,), jnp.float32)
    scale = gamma / jnp.sqrt(var + eps)          # eval-mode BN folded into conv
    return w * scale, beta - mean * scale


def _conv_bn_params(key, kh, kw, cin, cout, *, stride, pad, cin_pad, cout_pad):
    wf, bias = _fold_bn(key, (kh, kw, cin, cout), cout, kh * kw * cin)
    wf = jnp.pad(wf, ((0, 0), (0, 0), (0, cin_pad - cin), (0, cout_pad - cout)))
    w2d = wf.reshape(kh * kw * cin_pad, cout_pad).astype(jnp.bfloat16)
    b = jnp.pad(bias, (0, cout_pad - cout)).reshape(1, cout_pad)
    return {"w": w2d, "b": b.astype(jnp.float32), "kh": kh, "kw": kw,
            "stride": stride, "pad": pad, "cout_pad": cout_pad}


def _stem_params(key, cin, cout, cout_pad):
    """7x7 conv weight remapped for the s2d + width-im2col stem layout:
    channel index of the glue tensor is  s*32 + (p*2+q)*8 + c,  tap index = r,
    where (di, dj) = (2r+p, 2s+q)."""
    wf, bias = _fold_bn(key, (7, 7, cin, cout), cout, 49 * cin)
    w8 = jnp.pad(wf, ((0, 1), (0, 1), (0, 8 - cin), (0, 0)))     # (8,8,8,cout)
    w4 = w8.reshape(4, 2, 4, 2, 8, cout).transpose(0, 2, 1, 3, 4, 5)
    w4 = w4.reshape(4, 128, cout)
    w4 = jnp.pad(w4, ((0, 0), (0, 0), (0, cout_pad - cout)))
    w2d = w4.reshape(4 * 128, cout_pad).astype(jnp.bfloat16)
    b = jnp.pad(bias, (0, cout_pad - cout)).reshape(1, cout_pad)
    return {"w": w2d, "b": b.astype(jnp.float32), "cout_pad": cout_pad}


def init_params(key, in_ch=3, widths=(64, 128, 128, 128), blocks=(2, 2, 2, 2)):
    keys = iter(jax.random.split(key, 64))
    params = {"out_dim": widths[-1]}
    params["conv1"] = _stem_params(next(keys), in_ch, widths[0],
                                   _round_up(widths[0], _LANE))
    layers = []
    cin = widths[0]
    for li, (wd, nbk) in enumerate(zip(widths, blocks)):
        layer = []
        for bi in range(nbk):
            stride = 2 if (li > 0 and bi == 0) else 1
            cin_pad = _round_up(cin, _LANE)
            cout_pad = _round_up(wd, _LANE)
            blk = {
                "conv1": _conv_bn_params(next(keys), 3, 3, cin, wd, stride=stride,
                                         pad=1, cin_pad=cin_pad, cout_pad=cout_pad),
                "conv2": _conv_bn_params(next(keys), 3, 3, wd, wd, stride=1,
                                         pad=1, cin_pad=cout_pad, cout_pad=cout_pad),
            }
            if stride != 1 or cin != wd:
                blk["down"] = _conv_bn_params(next(keys), 1, 1, cin, wd,
                                              stride=stride, pad=0,
                                              cin_pad=cin_pad, cout_pad=cout_pad)
            layer.append(blk)
            cin = wd
        layers.append(layer)
    params["layers"] = layers
    return params


# ----------------------------------------------------------------------------
# Forward pass (mirrors torchvision ResNet BasicBlock topology, minus fc)
# ----------------------------------------------------------------------------
def basic_block(x, blk):
    identity = x
    out = conv_bn_act(x, blk["conv1"], relu=True)
    if "down" in blk:
        identity = conv_bn_act(x, blk["down"], relu=False)
    # second conv: folded BN + residual add + ReLU fused into the epilogue
    out = conv_bn_act(out, blk["conv2"], relu=True, residual=identity)
    return out


def resnet_forward(x_nchw, params):
    # NCHW (PyTorch) -> NHWC, bf16 MXU feed
    x = jnp.transpose(x_nchw, (0, 2, 3, 1)).astype(jnp.bfloat16)
    x = stem_conv(x, params["conv1"])                # conv1 + bn1 + relu
    x = maxpool_3x3_s2(x)                            # maxpool 3x3 / stride 2
    for layer in params["layers"]:                   # layer1 .. layer4
        for blk in layer:
            x = basic_block(x, blk)
    x = global_avgpool(x)                            # adaptive avgpool (1,1)
    return x[:, :params["out_dim"]]                  # drop lane pad == x.view(N, C)


if __name__ == "__main__":
    key = jax.random.PRNGKey(0)
    kx, kp = jax.random.split(key)
    x = jax.random.normal(kx, (2, 3, 64, 64), jnp.float32)   # NCHW, like PyTorch
    params = init_params(kp)

    out = resnet_forward(x, params)
    out = jax.block_until_ready(out)

    assert out.shape == (2, 128), out.shape
    assert bool(jnp.all(jnp.isfinite(out)))
    print("KERNEL_OK")
</pallas_src>

<mosaic_0001>
module attributes {stable_mosaic.version = 11 : i64} {
  func.func @_conv_kernel(%arg0: i32, %arg1: i32, %arg2: memref<1x35x32x128xbf16, #tpu.memory_space<vmem>>, %arg3: memref<512x128xbf16, #tpu.memory_space<vmem>>, %arg4: memref<1x128xf32, #tpu.memory_space<vmem>>, %arg5: memref<1x256x128xbf16, #tpu.memory_space<vmem>>) attributes {dimension_semantics = [#tpu.dimension_semantics<parallel>, #tpu.dimension_semantics<parallel>], iteration_bounds = array<i64: 2, 4>, scalar_prefetch = 0 : i64, scratch_operands = 0 : i64, tpu.core_type = #tpu.core_type<tc>, window_params = [{transform_indices = @transform_0, window_bounds = array<i64: 1, 35, 32, 128>}, {pipeline_mode = #tpu.pipeline_mode<synchronous>, transform_indices = @transform_1, window_bounds = array<i64: 512, 128>}, {pipeline_mode = #tpu.pipeline_mode<synchronous>, transform_indices = @transform_2, window_bounds = array<i64: 1, 128>}, {transform_indices = @transform_3, window_bounds = array<i64: 1, 256, 128>}]} {
    %c8_i32 = arith.constant 8 : i32
    %0 = arith.muli %arg1, %c8_i32 : i32
    %1 = tpu.assume_multiple %0, 8 : i32
    %c0_i32 = arith.constant 0 : i32
    %2 = arith.addi %1, %c0_i32 : i32
    %c0 = arith.constant 0 : index
    %3 = arith.index_cast %2 : i32 to index
    %c0_0 = arith.constant 0 : index
    %c0_1 = arith.constant 0 : index
    %4 = vector.load %arg2[%c0, %3, %c0_0, %c0_1] : memref<1x35x32x128xbf16, #tpu.memory_space<vmem>>, vector<1x8x32x128xbf16>
    %5 = vector.shape_cast %4 : vector<1x8x32x128xbf16> to vector<256x128xbf16>
    %c1_i32 = arith.constant 1 : i32
    %6 = arith.addi %1, %c1_i32 : i32
    %c0_2 = arith.constant 0 : index
    %7 = arith.index_cast %6 : i32 to index
    %c0_3 = arith.constant 0 : index
    %c0_4 = arith.constant 0 : index
    %8 = vector.load %arg2[%c0_2, %7, %c0_3, %c0_4] : memref<1x35x32x128xbf16, #tpu.memory_space<vmem>>, vector<1x8x32x128xbf16>
    %9 = vector.shape_cast %8 : vector<1x8x32x128xbf16> to vector<256x128xbf16>
    %10 = tpu.concatenate %5, %9 in 1 : vector<256x128xbf16>, vector<256x128xbf16> -> vector<256x256xbf16>
    %c0_5 = arith.constant 0 : index
    %c0_6 = arith.constant 0 : index
    %11 = vector.load %arg3[%c0_5, %c0_6] : memref<512x128xbf16, #tpu.memory_space<vmem>>, vector<256x128xbf16>
    %cst = arith.constant dense<0.000000e+00> : vector<256x128xf32>
    %12 = tpu.matmul %10, %11, %cst {dimension_numbers = #tpu.dot_dimension_numbers<[1], [0], [0], [1], [0, 0, 1, 1], [], []>} : vector<256x256xbf16>, vector<256x128xbf16>, vector<256x128xf32> -> vector<256x128xf32>
    %c2_i32 = arith.constant 2 : i32
    %13 = arith.addi %1, %c2_i32 : i32
    %c0_7 = arith.constant 0 : index
    %14 = arith.index_cast %13 : i32 to index
    %c0_8 = arith.constant 0 : index
    %c0_9 = arith.constant 0 : index
    %15 = vector.load %arg2[%c0_7, %14, %c0_8, %c0_9] : memref<1x35x32x128xbf16, #tpu.memory_space<vmem>>, vector<1x8x32x128xbf16>
    %16 = vector.shape_cast %15 : vector<1x8x32x128xbf16> to vector<256x128xbf16>
    %c3_i32 = arith.constant 3 : i32
    %17 = arith.addi %1, %c3_i32 : i32
    %c0_10 = arith.constant 0 : index
    %18 = arith.index_cast %17 : i32 to index
    %c0_11 = arith.constant 0 : index
    %c0_12 = arith.constant 0 : index
    %19 = vector.load %arg2[%c0_10, %18, %c0_11, %c0_12] : memref<1x35x32x128xbf16, #tpu.memory_space<vmem>>, vector<1x8x32x128xbf16>
    %20 = vector.shape_cast %19 : vector<1x8x32x128xbf16> to vector<256x128xbf16>
    %21 = tpu.concatenate %16, %20 in 1 : vector<256x128xbf16>, vector<256x128xbf16> -> vector<256x256xbf16>
    %c256 = arith.constant 256 : index
    %c0_13 = arith.constant 0 : index
    %22 = vector.load %arg3[%c256, %c0_13] : memref<512x128xbf16, #tpu.memory_space<vmem>>, vector<256x128xbf16>
    %cst_14 = arith.constant dense<0.000000e+00> : vector<256x128xf32>
    %23 = tpu.matmul %21, %22, %cst_14 {dimension_numbers = #tpu.dot_dimension_numbers<[1], [0], [0], [1], [0, 0, 1, 1], [], []>} : vector<256x256xbf16>, vector<256x128xbf16>, vector<256x128xf32> -> vector<256x128xf32>
    %24 = arith.addf %12, %23 : vector<256x128xf32>
    %c0_15 = arith.constant 0 : index
    %c0_16 = arith.constant 0 : index
    %25 = vector.load %arg4[%c0_15, %c0_16] : memref<1x128xf32, #tpu.memory_space<vmem>>, vector<1x128xf32>
    %26 = vector.broadcast %25 : vector<1x128xf32> to vector<256x128xf32>
    %27 = arith.addf %24, %26 : vector<256x128xf32>
    %cst_17 = arith.constant 0.000000e+00 : f32
    %28 = vector.broadcast %cst_17 : f32 to vector<256x128xf32>
    %29 = arith.maximumf %27, %28 : vector<256x128xf32>
    %30 = vector.shape_cast %29 : vector<256x128xf32> to vector<1x256x128xf32>
    %31 = arith.truncf %30 : vector<1x256x128xf32> to vector<1x256x128xbf16>
    %c0_18 = arith.constant 0 : index
    %c0_19 = arith.constant 0 : index
    %c0_20 = arith.constant 0 : index
    %32 = vector.load %arg5[%c0_18, %c0_19, %c0_20] : memref<1x256x128xbf16, #tpu.memory_space<vmem>>, vector<1x256x128xbf16>
    tpu.vector_store %arg5[%c0_18, %c0_19, %c0_20], %31 {strides = array<i32>} : memref<1x256x128xbf16, #tpu.memory_space<vmem>>, vector<1x256x128xbf16>,
    return
  }
  func.func @transform_0(%arg0: i32, %arg1: i32) -> (i32, i32, i32, i32) {
    %c0_i32 = arith.constant 0 : i32
    %c0_i32_0 = arith.constant 0 : i32
    %c0_i32_1 = arith.constant 0 : i32
    %c0_i32_2 = arith.constant 0 : i32
    return %arg0, %c0_i32, %c0_i32_0, %c0_i32_1 : i32, i32, i32, i32
  }
  func.func @transform_1(%arg0: i32, %arg1: i32) -> (i32, i32) {
    %c0_i32 = arith.constant 0 : i32
    %c0_i32_0 = arith.constant 0 : i32
    %c0_i32_1 = arith.constant 0 : i32
    return %c0_i32, %c0_i32_0 : i32, i32
  }
  func.func @transform_2(%arg0: i32, %arg1: i32) -> (i32, i32) {
    %c0_i32 = arith.constant 0 : i32
    %c0_i32_0 = arith.constant 0 : i32
    %c0_i32_1 = arith.constant 0 : i32
    return %c0_i32, %c0_i32_0 : i32, i32
  }
  func.func @transform_3(%arg0: i32, %arg1: i32) -> (i32, i32, i32) {
    %c0_i32 = arith.constant 0 : i32
    %c0_i32_0 = arith.constant 0 : i32
    return %arg0, %arg1, %c0_i32 : i32, i32, i32
  }
}

</mosaic_0001>

<llo_original>
// kernel: tpu_custom_call.1
$region0: #{tpu_custom_call.1}
  #allocation0 [shape = 'u32[]', space=smem, size = 0x4, offset = 0x4, fixed_abs, tag = 'smem constant byte address 0x4 - core index']
  #allocation1 [shape = 'u32[144,128]{1,0:T(1,128)}', space=vmem, size = 0x12000, scoped, tag = 'internal scratch']
  %s0 = inlined_call_operand.hbm [shape: bf16[2,35,32,128], index: 0, kind: input, shape index: {}]
  %s1 = inlined_call_operand.hbm [shape: bf16[512,128], index: 1, kind: input, shape index: {}]
  %s2 = inlined_call_operand.vmem [shape: f32[1,128], index: 2, kind: input, shape index: {}]
  %s3 = inlined_call_operand.hbm [shape: bf16[2,1024,128], index: 3, kind: output, shape index: {}]
  %s4 = sld [smem:[#allocation0]]
  $region53: #{tpu_custom_call.1} parent=0
    _
  %s6 = ssub.s32 1, %s4
  %s7 = scalar_select 0, %s6, %s4
  $region1: #{tpu_custom_call.1} parent=0
    #allocation2 [shape = 'u8[573440]{0}', space=vmem, size = 0x8c000, scoped, tag = 'input window, operand 0']
    #allocation3 [shape = 's32[2]{0}', space=sflag, size = 0x8, scoped, tag = 'scoped memory for tpu_custom_call.1']
    #allocation4 [shape = 's32[2]{0}', space=sflag, size = 0x8, scoped, tag = 'scoped memory for tpu_custom_call.1']
    #allocation5 [shape = 'u8[131072]{0}', space=vmem, size = 0x20000, scoped, tag = 'input window, operand 1, single buffered']
    #allocation6 [shape = 's32[1]{0}', space=sflag, size = 0x4, scoped, tag = 'scoped memory for tpu_custom_call.1']
    #allocation7 [shape = 'u8[131072]{0}', space=vmem, size = 0x20000, scoped, tag = 'output window, operand 0']
    %8 = vsyncpa [#allocation3], 0
    %s9 = scalar_lea.sflag [#allocation3], 1
    %10 = vsyncpa %s9, 0
    %11 = vsyncpa [#allocation6], 0
    %12 = vsyncpa [#allocation4], 0
    %s13 = scalar_lea.sflag [#allocation4], 1
    %14 = vsyncpa %s13, 0
    loop: start=0, step=1, limit=10
    $region2: #{tpu_custom_call.1} parent=1 // loop_pre_header
      _
    $region3: #{tpu_custom_call.1} parent=1 // loop_header
      %s16 = sphi 0, %s20
      %p17 = scmp.ge.s32.totalorder %s16, 10
      %s23 = sphi 0, %s35
      %s24 = sphi 0, %s31
      %s25 = sphi 0, %s23
      %s26 = sphi 0, %s24
      %s27 = sphi 0, %s25
      %s28 = sphi 0, %s26
      %s38 = sphi 0, %s40
      %s41 = sphi 0, %s38
      %s42 = sphi 0, %s41
      %s58 = sphi 0, %s42
      %s62 = sphi 0, %s62
      %s64 = sphi 0, %s62
      %s65 = sphi 0, %s64
      %s79 = sphi 0, %s65
      %s83 = sphi 0, %s83
      %s85 = sphi 0, %s83
      %s86 = sphi 0, %s85
      %s100 = sphi 0, %s86
      %s108 = sphi 0, %s110
      %s111 = sphi 0, %s108
      %s112 = sphi 0, %s111
      %s128 = sphi 0, %s112
    $region4: #{tpu_custom_call.1} parent=1 // loop_header_branch
      %19 = sbr.rel (%p17) target = $region8
    $region5: #{tpu_custom_call.1} parent=1 // loop_body
      %s21 = ssub.s32 %s16, 1
      %s22 = ssub.s32 %s16, 2
      %s29 = sadd.s32 1, %s24
      %p30 = scmp.ge.s32.totalorder %s29, 4
      %s31 = scalar_select %p30, 0, %s29
      %s32 = sadd.s32 1, %s23
      %s33 = scalar_select %p30, %s32, %s23
      %p34 = scmp.ge.s32.totalorder %s33, 2
      %s35 = scalar_select %p34, 0, %s33
      %s36 = ssub.s32 %s23, %s35
      %p37 = scmp.eq.s32.totalorder %s36, 0
      %s39 = sadd.s32 %s38, 1
      %s40 = scalar_select %p37, %s38, %s39
      %p43 = pneg %p37
      %p44 = scmp.eq.s32.totalorder %s16, 7
      %p45 = por %p43, %p44
      %p46 = scmp.ne.s32.totalorder %s38, %s41
      %p47 = scmp.eq.s32.totalorder %s16, 0
      %p48 = por %p46, %p47
      %p49 = scmp.ne.s32.totalorder %s38, %s41
      %p50 = scmp.eq.s32.totalorder %s21, 7
      %p51 = por %p49, %p50
      %p52 = scmp.ne.s32.totalorder %s41, %s42
      %p53 = scmp.eq.s32.totalorder %s21, 0
      %p54 = por %p52, %p53
      %p55 = scmp.ne.s32.totalorder %s41, %s42
      %p56 = scmp.eq.s32.totalorder %s22, 7
      %p57 = por %p55, %p56
      %p59 = scmp.ne.s32.totalorder %s42, %s58
      %p60 = scmp.eq.s32.totalorder %s22, 0
      %p61 = por %p59, %p60
      %s63 = sadd.s32 %s62, 1
      %p66 = scmp.eq.s32.totalorder %s16, 7
      %p67 = scmp.ne.s32.totalorder %s62, %s64
      %p68 = scmp.eq.s32.totalorder %s16, 0
      %p69 = por %p67, %p68
      %p70 = scmp.ne.s32.totalorder %s62, %s64
      %p71 = scmp.eq.s32.totalorder %s21, 7
      %p72 = por %p70, %p71
      %p73 = scmp.ne.s32.totalorder %s64, %s65
      %p74 = scmp.eq.s32.totalorder %s21, 0
      %p75 = por %p73, %p74
      %p76 = scmp.ne.s32.totalorder %s64, %s65
      %p77 = scmp.eq.s32.totalorder %s22, 7
      %p78 = por %p76, %p77
      %p80 = scmp.ne.s32.totalorder %s65, %s79
      %p81 = scmp.eq.s32.totalorder %s22, 0
      %p82 = por %p80, %p81
      %s84 = sadd.s32 %s83, 1
      %p87 = scmp.eq.s32.totalorder %s16, 7
      %p88 = scmp.ne.s32.totalorder %s83, %s85
      %p89 = scmp.eq.s32.totalorder %s16, 0
      %p90 = por %p88, %p89
      %p91 = scmp.ne.s32.totalorder %s83, %s85
      %p92 = scmp.eq.s32.totalorder %s21, 7
      %p93 = por %p91, %p92
      %p94 = scmp.ne.s32.totalorder %s85, %s86
      %p95 = scmp.eq.s32.totalorder %s21, 0
      %p96 = por %p94, %p95
      %p97 = scmp.ne.s32.totalorder %s85, %s86
      %p98 = scmp.eq.s32.totalorder %s22, 7
      %p99 = por %p97, %p98
      %p101 = scmp.ne.s32.totalorder %s86, %s100
      %p102 = scmp.eq.s32.totalorder %s22, 0
      %p103 = por %p101, %p102
      %s104 = ssub.s32 %s23, %s35
      %s105 = ssub.s32 %s24, %s31
      %s106 = sor.u32 %s104, %s105
      %p107 = scmp.eq.s32.totalorder %s106, 0
      %s109 = sadd.s32 %s108, 1
      %s110 = scalar_select %p107, %s108, %s109
      %p113 = pneg %p107
      %p114 = scmp.eq.s32.totalorder %s16, 7
      %p115 = por %p113, %p114
      %p116 = scmp.ne.s32.totalorder %s108, %s111
      %p117 = scmp.eq.s32.totalorder %s16, 0
      %p118 = por %p116, %p117
      %p119 = scmp.ne.s32.totalorder %s108, %s111
      %p120 = scmp.eq.s32.totalorder %s21, 7
      %p121 = por %p119, %p120
      %p122 = scmp.ne.s32.totalorder %s111, %s112
      %p123 = scmp.eq.s32.totalorder %s21, 0
      %p124 = por %p122, %p123
      %p125 = scmp.ne.s32.totalorder %s111, %s112
      %p126 = scmp.eq.s32.totalorder %s22, 7
      %p127 = por %p125, %p126
      %p129 = scmp.ne.s32.totalorder %s112, %s128
      %p130 = scmp.eq.s32.totalorder %s22, 0
      %p131 = por %p129, %p130
      %p132 = scmp.le.s32.totalorder 1, %s16
      %p133 = scmp.lt.s32.totalorder %s16, 9
      %p134 = pnand %p132, %p133
      %p135 = pneg %p134
      // Predicated region
      $region9: #{tpu_custom_call.1} parent=5 // pred_check
        _
      $region10: #{tpu_custom_call.1} parent=5 // pred_check_branch
        %137 = sbr.rel (%p134) target = $region12
      $region11: #{tpu_custom_call.1} parent=5 // pred_region
        %s138 = ssub.s32 %s16, 1
        // Predicated region
        $region13: #{tpu_custom_call.1} parent=11 // pred_check
          %p139 = pneg %p75
        $region14: #{tpu_custom_call.1} parent=11 // pred_check_branch
          %141 = sbr.rel (%p139) target = $region16
        $region15: #{tpu_custom_call.1} parent=11 // pred_region
          %s143 = ssub.s32 4096, 4096
          %144 = vsyncadd [#allocation6], %s143
          %s145 = sshll.u32 [#allocation5], 4
          %s146 = int_to_ptr.vmem [resolvable:$true] %s145
          %151 = dma.hbm_to_vmem [thread:$0]  %s1, 4096, %s146, [#allocation6], 64, 64, 4
        $region16: #{tpu_custom_call.1} parent=11 // pred_fallthru
          _
        // Predicated region
        $region17: #{tpu_custom_call.1} parent=11 // pred_check
          %p152 = pneg %p96
        $region18: #{tpu_custom_call.1} parent=11 // pred_check_branch
          %154 = sbr.rel (%p152) target = $region20
        $region19: #{tpu_custom_call.1} parent=11 // pred_region
          _
        $region20: #{tpu_custom_call.1} parent=11 // pred_fallthru
          _
      $region12: #{tpu_custom_call.1} parent=5 // pred_fallthru
        _
      %p155 = scmp.lt.s32.totalorder %s16, 8
      // Predicated region
      $region21: #{tpu_custom_call.1} parent=5 // pred_check
        %p156 = pneg %p155
      $region22: #{tpu_custom_call.1} parent=5 // pred_check_branch
        %158 = sbr.rel (%p156) target = $region24
      $region23: #{tpu_custom_call.1} parent=5 // pred_region
        // Predicated region
        $region25: #{tpu_custom_call.1} parent=23 // pred_check
          %p159 = pneg %p48
        $region26: #{tpu_custom_call.1} parent=23 // pred_check_branch
          %161 = sbr.rel (%p159) target = $region28
        $region27: #{tpu_custom_call.1} parent=23 // pred_region
          %s162 = sand.u32 %s38, 1
          %s163 = scalar_lea.sflag [#allocation3], %s162
          %s164 = sand.u32 %s38, 1
          %s165 = smul.addr %s164, 560
          %s166 = scalar_lea.vmem [#allocation2], %s165
          %s168 = ssub.s32 8960, 8960
          %169 = vsyncadd %s163, %s168
          %s170 = smul.addr %s23, 140
          %s171 = smul.addr %s170, 64
          %s172 = scalar_lea.hbm %s0, %s171
          %s173 = sshll.u32 %s166, 4
          %s174 = int_to_ptr.vmem [resolvable:$true] %s173
          %179 = dma.hbm_to_vmem [thread:$0]  %s172, 8960, %s174, %s163, 64, 64, 4
        $region28: #{tpu_custom_call.1} parent=23 // pred_fallthru
          _
      $region24: #{tpu_custom_call.1} parent=5 // pred_fallthru
        _
      %p180 = scmp.le.s32.totalorder 1, %s16
      %p181 = scmp.lt.s32.totalorder %s16, 9
      %p182 = pnand %p180, %p181
      %p183 = pneg %p182
      // Predicated region
      $region29: #{tpu_custom_call.1} parent=5 // pred_check
        _
      $region30: #{tpu_custom_call.1} parent=5 // pred_check_branch
        %185 = sbr.rel (%p182) target = $region32
      $region31: #{tpu_custom_call.1} parent=5 // pred_region
        %s186 = ssub.s32 %s16, 1
        %s187 = sand.u32 %s41, 1
        %s188 = scalar_lea.sflag [#allocation3], %s187
        %s189 = sand.u32 %s41, 1
        %s190 = smul.addr %s189, 560
        %s191 = scalar_lea.vmem [#allocation2], %s190
        // Predicated region
        $region33: #{tpu_custom_call.1} parent=31 // pred_check
          %p192 = pneg %p54
        $region34: #{tpu_custom_call.1} parent=31 // pred_check_branch
          %194 = sbr.rel (%p192) target = $region36
        $region35: #{tpu_custom_call.1} parent=31 // pred_region
          %195 = dma.done %s188, 8960
        $region36: #{tpu_custom_call.1} parent=31 // pred_fallthru
          _
        // Predicated region
        $region37: #{tpu_custom_call.1} parent=31 // pred_check
          %p196 = pneg %p75
        $region38: #{tpu_custom_call.1} parent=31 // pred_check_branch
          %198 = sbr.rel (%p196) target = $region40
        $region39: #{tpu_custom_call.1} parent=31 // pred_region
          %199 = dma.done [#allocation6], 4096
        $region40: #{tpu_custom_call.1} parent=31 // pred_fallthru
          _
        %s200 = sand.u32 %s41, 1
        %s201 = scalar_lea.sflag [#allocation3], %s200
        %s202 = sand.u32 %s41, 1
        %s203 = smul.addr %s202, 560
        %s204 = scalar_lea.vmem [#allocation2], %s203
        %p205 = pneg %p54
        %p206 = pneg %p51
        %p207 = pneg %p75
        %p208 = pneg %p72
        %p209 = pneg %p96
        %p210 = pneg %p93
        %p211 = pneg %p124
        %p212 = pneg %p121
        %s213 = sand.u32 %s111, 1
        %s214 = scalar_lea.sflag [#allocation4], %s213
        %s215 = sand.u32 %s111, 1
        %s216 = smul.addr %s215, 128
        %s217 = scalar_lea.vmem [#allocation7], %s216
        %s218 = smul.u32 32, %s26
        %s220 = smul.u32 %s26, 8
        %s221 = smul.u32 %s220, 4
        %s222 = smul.addr %s221, 4
        %s223 = scalar_lea.vmem %s191, %s222 [#allocation2]
        %v224 = vld [vmem:[%s223] sm:$0xf]
        %v225 = vld [vmem:[%s223 + $0x4] sm:$0xf]
        %v226 = vld [vmem:[%s223 + $0x8] sm:$0xf]
        %v227 = vld [vmem:[%s223 + $0xc] sm:$0xf]
        %v228 = vld [vmem:[%s223 + $0x10] sm:$0xf]
        %v229 = vld [vmem:[%s223 + $0x14] sm:$0xf]
        %v230 = vld [vmem:[%s223 + $0x18] sm:$0xf]
        %v231 = vld [vmem:[%s223 + $0x1c] sm:$0xf]
        %v232 = vld [vmem:[%s223 + $0x20] sm:$0xf]
        %v233 = vld [vmem:[%s223 + $0x24] sm:$0xf]
        %v234 = vld [vmem:[%s223 + $0x28] sm:$0xf]
        %v235 = vld [vmem:[%s223 + $0x2c] sm:$0xf]
        %v236 = vld [vmem:[%s223 + $0x30] sm:$0xf]
        %v237 = vld [vmem:[%s223 + $0x34] sm:$0xf]
        %v238 = vld [vmem:[%s223 + $0x38] sm:$0xf]
        %v239 = vld [vmem:[%s223 + $0x3c] sm:$0xf]
        %v240 = vld [vmem:[%s223 + $0x40] sm:$0xf]
        %v241 = vld [vmem:[%s223 + $0x44] sm:$0xf]
        %v242 = vld [vmem:[%s223 + $0x48] sm:$0xf]
        %v243 = vld [vmem:[%s223 + $0x4c] sm:$0xf]
        %v244 = vld [vmem:[%s223 + $0x50] sm:$0xf]
        %v245 = vld [vmem:[%s223 + $0x54] sm:$0xf]
        %v246 = vld [vmem:[%s223 + $0x58] sm:$0xf]
        %v247 = vld [vmem:[%s223 + $0x5c] sm:$0xf]
        %v248 = vld [vmem:[%s223 + $0x60] sm:$0xf]
        %v249 = vld [vmem:[%s223 + $0x64] sm:$0xf]
        %v250 = vld [vmem:[%s223 + $0x68] sm:$0xf]
        %v251 = vld [vmem:[%s223 + $0x6c] sm:$0xf]
        %v252 = vld [vmem:[%s223 + $0x70] sm:$0xf]
        %v253 = vld [vmem:[%s223 + $0x74] sm:$0xf]
        %v254 = vld [vmem:[%s223 + $0x78] sm:$0xf]
        %v255 = vld [vmem:[%s223 + $0x7c] sm:$0xf]
        %s256 = sadd.s32 %s220, 1
        %s257 = smul.u32 %s256, 4
        %s258 = smul.addr %s257, 4
        %s259 = scalar_lea.vmem %s191, %s258 [#allocation2]
        %v260 = vld [vmem:[%s259] sm:$0xf]
        %v261 = vld [vmem:[%s259 + $0x4] sm:$0xf]
        %v262 = vld [vmem:[%s259 + $0x8] sm:$0xf]
        %v263 = vld [vmem:[%s259 + $0xc] sm:$0xf]
        %v264 = vld [vmem:[%s259 + $0x10] sm:$0xf]
        %v265 = vld [vmem:[%s259 + $0x14] sm:$0xf]
        %v266 = vld [vmem:[%s259 + $0x18] sm:$0xf]
        %v267 = vld [vmem:[%s259 + $0x1c] sm:$0xf]
        %v268 = vld [vmem:[%s259 + $0x20] sm:$0xf]
        %v269 = vld [vmem:[%s259 + $0x24] sm:$0xf]
        %v270 = vld [vmem:[%s259 + $0x28] sm:$0xf]
        %v271 = vld [vmem:[%s259 + $0x2c] sm:$0xf]
        %v272 = vld [vmem:[%s259 + $0x30] sm:$0xf]
        %v273 = vld [vmem:[%s259 + $0x34] sm:$0xf]
        %v274 = vld [vmem:[%s259 + $0x38] sm:$0xf]
        %v275 = vld [vmem:[%s259 + $0x3c] sm:$0xf]
        %v276 = vld [vmem:[%s259 + $0x40] sm:$0xf]
        %v277 = vld [vmem:[%s259 + $0x44] sm:$0xf]
        %v278 = vld [vmem:[%s259 + $0x48] sm:$0xf]
        %v279 = vld [vmem:[%s259 + $0x4c] sm:$0xf]
        %v280 = vld [vmem:[%s259 + $0x50] sm:$0xf]
        %v281 = vld [vmem:[%s259 + $0x54] sm:$0xf]
        %v282 = vld [vmem:[%s259 + $0x58] sm:$0xf]
        %v283 = vld [vmem:[%s259 + $0x5c] sm:$0xf]
        %v284 = vld [vmem:[%s259 + $0x60] sm:$0xf]
        %v285 = vld [vmem:[%s259 + $0x64] sm:$0xf]
        %v286 = vld [vmem:[%s259 + $0x68] sm:$0xf]
        %v287 = vld [vmem:[%s259 + $0x6c] sm:$0xf]
        %v288 = vld [vmem:[%s259 + $0x70] sm:$0xf]
        %v289 = vld [vmem:[%s259 + $0x74] sm:$0xf]
        %v290 = vld [vmem:[%s259 + $0x78] sm:$0xf]
        %v291 = vld [vmem:[%s259 + $0x7c] sm:$0xf]
        %v324 = vunpack.c.l.b16 %v224
        %v325 = vunpack.c.l.b16 %v225
        %v326 = vunpack.c.l.b16 %v226
        %v327 = vunpack.c.l.b16 %v227
        %v328 = vunpack.c.l.b16 %v228
        %v329 = vunpack.c.l.b16 %v229
        %v330 = vunpack.c.l.b16 %v230
        %v331 = vunpack.c.l.b16 %v231
        %v332 = vunpack.c.l.b16 %v232
        %v333 = vunpack.c.l.b16 %v233
        %v334 = vunpack.c.l.b16 %v234
        %v335 = vunpack.c.l.b16 %v235
        %v336 = vunpack.c.l.b16 %v236
        %v337 = vunpack.c.l.b16 %v237
        %v338 = vunpack.c.l.b16 %v238
        %v339 = vunpack.c.l.b16 %v239
        %v340 = vunpack.c.l.b16 %v240
        %v341 = vunpack.c.l.b16 %v241
        %v342 = vunpack.c.l.b16 %v242
        %v343 = vunpack.c.l.b16 %v243
        %v344 = vunpack.c.l.b16 %v244
        %v345 = vunpack.c.l.b16 %v245
        %v346 = vunpack.c.l.b16 %v246
        %v347 = vunpack.c.l.b16 %v247
        %v348 = vunpack.c.l.b16 %v248
        %v349 = vunpack.c.l.b16 %v249
        %v350 = vunpack.c.l.b16 %v250
        %v351 = vunpack.c.l.b16 %v251
        %v352 = vunpack.c.l.b16 %v252
        %v353 = vunpack.c.l.b16 %v253
        %v354 = vunpack.c.l.b16 %v254
        %v355 = vunpack.c.l.b16 %v255
        %v356 = vpack.c.b16 %v325, %v324
        %v357 = vpack.c.b16 %v327, %v326
        %v358 = vpack.c.b16 %v329, %v328
        %v359 = vpack.c.b16 %v331, %v330
        %v360 = vpack.c.b16 %v333, %v332
        %v361 = vpack.c.b16 %v335, %v334
        %v362 = vpack.c.b16 %v337, %v336
        %v363 = vpack.c.b16 %v339, %v338
        %v364 = vpack.c.b16 %v341, %v340
        %v365 = vpack.c.b16 %v343, %v342
        %v366 = vpack.c.b16 %v345, %v344
        %v367 = vpack.c.b16 %v347, %v346
        %v368 = vpack.c.b16 %v349, %v348
        %v369 = vpack.c.b16 %v351, %v350
        %v370 = vpack.c.b16 %v353, %v352
        %v371 = vpack.c.b16 %v355, %v354
        %v420 = vunpack.c.l.b16 %v260
        %v421 = vunpack.c.l.b16 %v261
        %v422 = vunpack.c.l.b16 %v262
        %v423 = vunpack.c.l.b16 %v263
        %v424 = vunpack.c.l.b16 %v264
        %v425 = vunpack.c.l.b16 %v265
        %v426 = vunpack.c.l.b16 %v266
        %v427 = vunpack.c.l.b16 %v267
        %v428 = vunpack.c.l.b16 %v268
        %v429 = vunpack.c.l.b16 %v269
        %v430 = vunpack.c.l.b16 %v270
        %v431 = vunpack.c.l.b16 %v271
        %v432 = vunpack.c.l.b16 %v272
        %v433 = vunpack.c.l.b16 %v273
        %v434 = vunpack.c.l.b16 %v274
        %v435 = vunpack.c.l.b16 %v275
        %v436 = vunpack.c.l.b16 %v276
        %v437 = vunpack.c.l.b16 %v277
        %v438 = vunpack.c.l.b16 %v278
        %v439 = vunpack.c.l.b16 %v279
        %v440 = vunpack.c.l.b16 %v280
        %v441 = vunpack.c.l.b16 %v281
        %v442 = vunpack.c.l.b16 %v282
        %v443 = vunpack.c.l.b16 %v283
        %v444 = vunpack.c.l.b16 %v284
        %v445 = vunpack.c.l.b16 %v285
        %v446 = vunpack.c.l.b16 %v286
        %v447 = vunpack.c.l.b16 %v287
        %v448 = vunpack.c.l.b16 %v288
        %v449 = vunpack.c.l.b16 %v289
        %v450 = vunpack.c.l.b16 %v290
        %v451 = vunpack.c.l.b16 %v291
        %v452 = vpack.c.b16 %v421, %v420
        %v453 = vpack.c.b16 %v423, %v422
        %v454 = vpack.c.b16 %v425, %v424
        %v455 = vpack.c.b16 %v427, %v426
        %v456 = vpack.c.b16 %v429, %v428
        %v457 = vpack.c.b16 %v431, %v430
        %v458 = vpack.c.b16 %v433, %v432
        %v459 = vpack.c.b16 %v435, %v434
        %v460 = vpack.c.b16 %v437, %v436
        %v461 = vpack.c.b16 %v439, %v438
        %v462 = vpack.c.b16 %v441, %v440
        %v463 = vpack.c.b16 %v443, %v442
        %v464 = vpack.c.b16 %v445, %v444
        %v465 = vpack.c.b16 %v447, %v446
        %v466 = vpack.c.b16 %v449, %v448
        %v467 = vpack.c.b16 %v451, %v450
        %v484 = vld [vmem:[#allocation5] sm:$0xf]
        %v485 = vld [vmem:[#allocation5 + $0x4] sm:$0xf]
        %v486 = vld [vmem:[#allocation5 + $0x8] sm:$0xf]
        %v487 = vld [vmem:[#allocation5 + $0xc] sm:$0xf]
        %v488 = vld [vmem:[#allocation5 + $0x10] sm:$0xf]
        %v489 = vld [vmem:[#allocation5 + $0x14] sm:$0xf]
        %v490 = vld [vmem:[#allocation5 + $0x18] sm:$0xf]
        %v491 = vld [vmem:[#allocation5 + $0x1c] sm:$0xf]
        %v492 = vld [vmem:[#allocation5 + $0x20] sm:$0xf]
        %v493 = vld [vmem:[#allocation5 + $0x24] sm:$0xf]
        %v494 = vld [vmem:[#allocation5 + $0x28] sm:$0xf]
        %v495 = vld [vmem:[#allocation5 + $0x2c] sm:$0xf]
        %v496 = vld [vmem:[#allocation5 + $0x30] sm:$0xf]
        %v497 = vld [vmem:[#allocation5 + $0x34] sm:$0xf]
        %v498 = vld [vmem:[#allocation5 + $0x38] sm:$0xf]
        %v499 = vld [vmem:[#allocation5 + $0x3c] sm:$0xf]
        %v500 = vld [vmem:[#allocation5 + $0x40] sm:$0xf]
        %v501 = vld [vmem:[#allocation5 + $0x44] sm:$0xf]
        %v502 = vld [vmem:[#allocation5 + $0x48] sm:$0xf]
        %v503 = vld [vmem:[#allocation5 + $0x4c] sm:$0xf]
        %v504 = vld [vmem:[#allocation5 + $0x50] sm:$0xf]
        %v505 = vld [vmem:[#allocation5 + $0x54] sm:$0xf]
        %v506 = vld [vmem:[#allocation5 + $0x58] sm:$0xf]
        %v507 = vld [vmem:[#allocation5 + $0x5c] sm:$0xf]
        %v508 = vld [vmem:[#allocation5 + $0x60] sm:$0xf]
        %v509 = vld [vmem:[#allocation5 + $0x64] sm:$0xf]
        %v510 = vld [vmem:[#allocation5 + $0x68] sm:$0xf]
        %v511 = vld [vmem:[#allocation5 + $0x6c] sm:$0xf]
        %v512 = vld [vmem:[#allocation5 + $0x70] sm:$0xf]
        %v513 = vld [vmem:[#allocation5 + $0x74] sm:$0xf]
        %v514 = vld [vmem:[#allocation5 + $0x78] sm:$0xf]
        %v515 = vld [vmem:[#allocation5 + $0x7c] sm:$0xf]
        %s516 = sadd.s32 %s220, 2
        %s517 = smul.u32 %s516, 4
        %s518 = smul.addr %s517, 4
        %s519 = scalar_lea.vmem %s191, %s518 [#allocation2]
        %v520 = vld [vmem:[%s519] sm:$0xf]
        %v521 = vld [vmem:[%s519 + $0x4] sm:$0xf]
        %v522 = vld [vmem:[%s519 + $0x8] sm:$0xf]
        %v523 = vld [vmem:[%s519 + $0xc] sm:$0xf]
        %v524 = vld [vmem:[%s519 + $0x10] sm:$0xf]
        %v525 = vld [vmem:[%s519 + $0x14] sm:$0xf]
        %v526 = vld [vmem:[%s519 + $0x18] sm:$0xf]
        %v527 = vld [vmem:[%s519 + $0x1c] sm:$0xf]
        %v528 = vld [vmem:[%s519 + $0x20] sm:$0xf]
        %v529 = vld [vmem:[%s519 + $0x24] sm:$0xf]
        %v530 = vld [vmem:[%s519 + $0x28] sm:$0xf]
        %v531 = vld [vmem:[%s519 + $0x2c] sm:$0xf]
        %v532 = vld [vmem:[%s519 + $0x30] sm:$0xf]
        %v533 = vld [vmem:[%s519 + $0x34] sm:$0xf]
        %v534 = vld [vmem:[%s519 + $0x38] sm:$0xf]
        %v535 = vld [vmem:[%s519 + $0x3c] sm:$0xf]
        %v536 = vld [vmem:[%s519 + $0x40] sm:$0xf]
        %v537 = vld [vmem:[%s519 + $0x44] sm:$0xf]
        %v538 = vld [vmem:[%s519 + $0x48] sm:$0xf]
        %v539 = vld [vmem:[%s519 + $0x4c] sm:$0xf]
        %v540 = vld [vmem:[%s519 + $0x50] sm:$0xf]
        %v541 = vld [vmem:[%s519 + $0x54] sm:$0xf]
        %v542 = vld [vmem:[%s519 + $0x58] sm:$0xf]
        %v543 = vld [vmem:[%s519 + $0x5c] sm:$0xf]
        %v544 = vld [vmem:[%s519 + $0x60] sm:$0xf]
        %v545 = vld [vmem:[%s519 + $0x64] sm:$0xf]
        %v546 = vld [vmem:[%s519 + $0x68] sm:$0xf]
        %v547 = vld [vmem:[%s519 + $0x6c] sm:$0xf]
        %v548 = vld [vmem:[%s519 + $0x70] sm:$0xf]
        %v549 = vld [vmem:[%s519 + $0x74] sm:$0xf]
        %v550 = vld [vmem:[%s519 + $0x78] sm:$0xf]
        %v551 = vld [vmem:[%s519 + $0x7c] sm:$0xf]
        %s552 = sadd.s32 %s220, 3
        %s553 = smul.u32 %s552, 4
        %s554 = smul.addr %s553, 4
        %s555 = scalar_lea.vmem %s191, %s554 [#allocation2]
        %v556 = vld [vmem:[%s555] sm:$0xf]
        %v557 = vld [vmem:[%s555 + $0x4] sm:$0xf]
        %v558 = vld [vmem:[%s555 + $0x8] sm:$0xf]
        %v559 = vld [vmem:[%s555 + $0xc] sm:$0xf]
        %v560 = vld [vmem:[%s555 + $0x10] sm:$0xf]
        %v561 = vld [vmem:[%s555 + $0x14] sm:$0xf]
        %v562 = vld [vmem:[%s555 + $0x18] sm:$0xf]
        %v563 = vld [vmem:[%s555 + $0x1c] sm:$0xf]
        %v564 = vld [vmem:[%s555 + $0x20] sm:$0xf]
        %v565 = vld [vmem:[%s555 + $0x24] sm:$0xf]
        %v566 = vld [vmem:[%s555 + $0x28] sm:$0xf]
        %v567 = vld [vmem:[%s555 + $0x2c] sm:$0xf]
        %v568 = vld [vmem:[%s555 + $0x30] sm:$0xf]
        %v569 = vld [vmem:[%s555 + $0x34] sm:$0xf]
        %v570 = vld [vmem:[%s555 + $0x38] sm:$0xf]
        %v571 = vld [vmem:[%s555 + $0x3c] sm:$0xf]
        %v572 = vld [vmem:[%s555 + $0x40] sm:$0xf]
        %v573 = vld [vmem:[%s555 + $0x44] sm:$0xf]
        %v574 = vld [vmem:[%s555 + $0x48] sm:$0xf]
        %v575 = vld [vmem:[%s555 + $0x4c] sm:$0xf]
        %v576 = vld [vmem:[%s555 + $0x50] sm:$0xf]
        %v577 = vld [vmem:[%s555 + $0x54] sm:$0xf]
        %v578 = vld [vmem:[%s555 + $0x58] sm:$0xf]
        %v579 = vld [vmem:[%s555 + $0x5c] sm:$0xf]
        %v580 = vld [vmem:[%s555 + $0x60] sm:$0xf]
        %v581 = vld [vmem:[%s555 + $0x64] sm:$0xf]
        %v582 = vld [vmem:[%s555 + $0x68] sm:$0xf]
        %v583 = vld [vmem:[%s555 + $0x6c] sm:$0xf]
        %v584 = vld [vmem:[%s555 + $0x70] sm:$0xf]
        %v585 = vld [vmem:[%s555 + $0x74] sm:$0xf]
        %v586 = vld [vmem:[%s555 + $0x78] sm:$0xf]
        %v587 = vld [vmem:[%s555 + $0x7c] sm:$0xf]
        %v620 = vunpack.c.l.b16 %v520
        %v621 = vunpack.c.l.b16 %v521
        %v622 = vunpack.c.l.b16 %v522
        %v623 = vunpack.c.l.b16 %v523
        %v624 = vunpack.c.l.b16 %v524
        %v625 = vunpack.c.l.b16 %v525
        %v626 = vunpack.c.l.b16 %v526
        %v627 = vunpack.c.l.b16 %v527
        %v628 = vunpack.c.l.b16 %v528
        %v629 = vunpack.c.l.b16 %v529
        %v630 = vunpack.c.l.b16 %v530
        %v631 = vunpack.c.l.b16 %v531
        %v632 = vunpack.c.l.b16 %v532
        %v633 = vunpack.c.l.b16 %v533
        %v634 = vunpack.c.l.b16 %v534
        %v635 = vunpack.c.l.b16 %v535
        %v636 = vunpack.c.l.b16 %v536
        %v637 = vunpack.c.l.b16 %v537
        %v638 = vunpack.c.l.b16 %v538
        %v639 = vunpack.c.l.b16 %v539
        %v640 = vunpack.c.l.b16 %v540
        %v641 = vunpack.c.l.b16 %v541
        %v642 = vunpack.c.l.b16 %v542
        %v643 = vunpack.c.l.b16 %v543
        %v644 = vunpack.c.l.b16 %v544
        %v645 = vunpack.c.l.b16 %v545
        %v646 = vunpack.c.l.b16 %v546
        %v647 = vunpack.c.l.b16 %v547
        %v648 = vunpack.c.l.b16 %v548
        %v649 = vunpack.c.l.b16 %v549
        %v650 = vunpack.c.l.b16 %v550
        %v651 = vunpack.c.l.b16 %v551
        %v652 = vpack.c.b16 %v621, %v620
        %v653 = vpack.c.b16 %v623, %v622
        %v654 = vpack.c.b16 %v625, %v624
        %v655 = vpack.c.b16 %v627, %v626
        %v656 = vpack.c.b16 %v629, %v628
        %v657 = vpack.c.b16 %v631, %v630
        %v658 = vpack.c.b16 %v633, %v632
        %v659 = vpack.c.b16 %v635, %v634
        %v660 = vpack.c.b16 %v637, %v636
        %v661 = vpack.c.b16 %v639, %v638
        %v662 = vpack.c.b16 %v641, %v640
        %v663 = vpack.c.b16 %v643, %v642
        %v664 = vpack.c.b16 %v645, %v644
        %v665 = vpack.c.b16 %v647, %v646
        %v666 = vpack.c.b16 %v649, %v648
        %v667 = vpack.c.b16 %v651, %v650
        %v716 = vunpack.c.l.b16 %v556
        %v717 = vunpack.c.l.b16 %v557
        %v718 = vunpack.c.l.b16 %v558
        %v719 = vunpack.c.l.b16 %v559
        %v720 = vunpack.c.l.b16 %v560
        %v721 = vunpack.c.l.b16 %v561
        %v722 = vunpack.c.l.b16 %v562
        %v723 = vunpack.c.l.b16 %v563
        %v724 = vunpack.c.l.b16 %v564
        %v725 = vunpack.c.l.b16 %v565
        %v726 = vunpack.c.l.b16 %v566
        %v727 = vunpack.c.l.b16 %v567
        %v728 = vunpack.c.l.b16 %v568
        %v729 = vunpack.c.l.b16 %v569
        %v730 = vunpack.c.l.b16 %v570
        %v731 = vunpack.c.l.b16 %v571
        %v732 = vunpack.c.l.b16 %v572
        %v733 = vunpack.c.l.b16 %v573
        %v734 = vunpack.c.l.b16 %v574
        %v735 = vunpack.c.l.b16 %v575
        %v736 = vunpack.c.l.b16 %v576
        %v737 = vunpack.c.l.b16 %v577
        %v738 = vunpack.c.l.b16 %v578
        %v739 = vunpack.c.l.b16 %v579
        %v740 = vunpack.c.l.b16 %v580
        %v741 = vunpack.c.l.b16 %v581
        %v742 = vunpack.c.l.b16 %v582
        %v743 = vunpack.c.l.b16 %v583
        %v744 = vunpack.c.l.b16 %v584
        %v745 = vunpack.c.l.b16 %v585
        %v746 = vunpack.c.l.b16 %v586
        %v747 = vunpack.c.l.b16 %v587
        %v748 = vpack.c.b16 %v717, %v716
        %v749 = vpack.c.b16 %v719, %v718
        %v750 = vpack.c.b16 %v721, %v720
        %v751 = vpack.c.b16 %v723, %v722
        %v752 = vpack.c.b16 %v725, %v724
        %v753 = vpack.c.b16 %v727, %v726
        %v754 = vpack.c.b16 %v729, %v728
        %v755 = vpack.c.b16 %v731, %v730
        %v756 = vpack.c.b16 %v733, %v732
        %v757 = vpack.c.b16 %v735, %v734
        %v758 = vpack.c.b16 %v737, %v736
        %v759 = vpack.c.b16 %v739, %v738
        %v760 = vpack.c.b16 %v741, %v740
        %v761 = vpack.c.b16 %v743, %v742
        %v762 = vpack.c.b16 %v745, %v744
        %v763 = vpack.c.b16 %v747, %v746
        %v780 = vld [vmem:[#allocation5 + $0x80] sm:$0xf]
        %v781 = vld [vmem:[#allocation5 + $0x84] sm:$0xf]
        %v782 = vld [vmem:[#allocation5 + $0x88] sm:$0xf]
        %v783 = vld [vmem:[#allocation5 + $0x8c] sm:$0xf]
        %v784 = vld [vmem:[#allocation5 + $0x90] sm:$0xf]
        %v785 = vld [vmem:[#allocation5 + $0x94] sm:$0xf]
        %v786 = vld [vmem:[#allocation5 + $0x98] sm:$0xf]
        %v787 = vld [vmem:[#allocation5 + $0x9c] sm:$0xf]
        %v788 = vld [vmem:[#allocation5 + $0xa0] sm:$0xf]
        %v789 = vld [vmem:[#allocation5 + $0xa4] sm:$0xf]
        %v790 = vld [vmem:[#allocation5 + $0xa8] sm:$0xf]
        %v791 = vld [vmem:[#allocation5 + $0xac] sm:$0xf]
        %v792 = vld [vmem:[#allocation5 + $0xb0] sm:$0xf]
        %v793 = vld [vmem:[#allocation5 + $0xb4] sm:$0xf]
        %v794 = vld [vmem:[#allocation5 + $0xb8] sm:$0xf]
        %v795 = vld [vmem:[#allocation5 + $0xbc] sm:$0xf]
        %v796 = vld [vmem:[#allocation5 + $0xc0] sm:$0xf]
        %v797 = vld [vmem:[#allocation5 + $0xc4] sm:$0xf]
        %v798 = vld [vmem:[#allocation5 + $0xc8] sm:$0xf]
        %v799 = vld [vmem:[#allocation5 + $0xcc] sm:$0xf]
        %v800 = vld [vmem:[#allocation5 + $0xd0] sm:$0xf]
        %v801 = vld [vmem:[#allocation5 + $0xd4] sm:$0xf]
        %v802 = vld [vmem:[#allocation5 + $0xd8] sm:$0xf]
        %v803 = vld [vmem:[#allocation5 + $0xdc] sm:$0xf]
        %v804 = vld [vmem:[#allocation5 + $0xe0] sm:$0xf]
        %v805 = vld [vmem:[#allocation5 + $0xe4] sm:$0xf]
        %v806 = vld [vmem:[#allocation5 + $0xe8] sm:$0xf]
        %v807 = vld [vmem:[#allocation5 + $0xec] sm:$0xf]
        %v808 = vld [vmem:[#allocation5 + $0xf0] sm:$0xf]
        %v809 = vld [vmem:[#allocation5 + $0xf4] sm:$0xf]
        %v810 = vld [vmem:[#allocation5 + $0xf8] sm:$0xf]
        %v811 = vld [vmem:[#allocation5 + $0xfc] sm:$0xf]
        %v844 = vunpack.c.l.b16 %v780
        %v845 = vunpack.c.l.b16 %v781
        %v846 = vunpack.c.l.b16 %v782
        %v847 = vunpack.c.l.b16 %v783
        %v848 = vunpack.c.l.b16 %v784
        %v849 = vunpack.c.l.b16 %v785
        %v850 = vunpack.c.l.b16 %v786
        %v851 = vunpack.c.l.b16 %v787
        %v852 = vunpack.c.l.b16 %v788
        %v853 = vunpack.c.l.b16 %v789
        %v854 = vunpack.c.l.b16 %v790
        %v855 = vunpack.c.l.b16 %v791
        %v856 = vunpack.c.l.b16 %v792
        %v857 = vunpack.c.l.b16 %v793
        %v858 = vunpack.c.l.b16 %v794
        %v859 = vunpack.c.l.b16 %v795
        %v860 = vunpack.c.l.b16 %v796
        %v861 = vunpack.c.l.b16 %v797
        %v862 = vunpack.c.l.b16 %v798
        %v863 = vunpack.c.l.b16 %v799
        %v864 = vunpack.c.l.b16 %v800
        %v865 = vunpack.c.l.b16 %v801
        %v866 = vunpack.c.l.b16 %v802
        %v867 = vunpack.c.l.b16 %v803
        %v868 = vunpack.c.l.b16 %v804
        %v869 = vunpack.c.l.b16 %v805
        %v870 = vunpack.c.l.b16 %v806
        %v871 = vunpack.c.l.b16 %v807
        %v872 = vunpack.c.l.b16 %v808
        %v873 = vunpack.c.l.b16 %v809
        %v874 = vunpack.c.l.b16 %v810
        %v875 = vunpack.c.l.b16 %v811
        %v876 = vpack.c.b16 %v845, %v844
        %v877 = vpack.c.b16 %v847, %v846
        %v878 = vpack.c.b16 %v849, %v848
        %v879 = vpack.c.b16 %v851, %v850
        %v880 = vpack.c.b16 %v853, %v852
        %v881 = vpack.c.b16 %v855, %v854
        %v882 = vpack.c.b16 %v857, %v856
        %v883 = vpack.c.b16 %v859, %v858
        %v884 = vpack.c.b16 %v861, %v860
        %v885 = vpack.c.b16 %v863, %v862
        %v886 = vpack.c.b16 %v865, %v864
        %v887 = vpack.c.b16 %v867, %v866
        %v888 = vpack.c.b16 %v869, %v868
        %v889 = vpack.c.b16 %v871, %v870
        %v890 = vpack.c.b16 %v873, %v872
        %v891 = vpack.c.b16 %v875, %v874
        %908 = vmatprep.subr.bf16.mxu0 0
        %909 = vmatpush1.bf16.msra.mxu0 %v876
        %910 = vmatprep.subr.bf16.mxu0 0
        %911 = vmatpush1.bf16.msra.mxu0 %v877
        %912 = vmatprep.subr.bf16.mxu0 0
        %913 = vmatpush1.bf16.msra.mxu0 %v878
        %914 = vmatprep.subr.bf16.mxu0 0
        %915 = vmatpush1.bf16.msra.mxu0 %v879
        %916 = vmatprep.subr.bf16.mxu0 0
        %917 = vmatpush1.bf16.msra.mxu0 %v880
        %918 = vmatprep.subr.bf16.mxu0 0
        %919 = vmatpush1.bf16.msra.mxu0 %v881
        %920 = vmatprep.subr.bf16.mxu0 0
        %921 = vmatpush1.bf16.msra.mxu0 %v882
        %922 = vmatprep.subr.bf16.mxu0 0
        %923 = vmatpush1.bf16.msra.mxu0 %v883
        %924 = vmatprep.subr.bf16.mxu0 0
        %925 = vmatpush1.bf16.msra.mxu0 %v884
        %926 = vmatprep.subr.bf16.mxu0 0
        %927 = vmatpush1.bf16.msra.mxu0 %v885
        %928 = vmatprep.subr.bf16.mxu0 0
        %929 = vmatpush1.bf16.msra.mxu0 %v886
        %930 = vmatprep.subr.bf16.mxu0 0
        %931 = vmatpush1.bf16.msra.mxu0 %v887
        %932 = vmatprep.subr.bf16.mxu0 0
        %933 = vmatpush1.bf16.msra.mxu0 %v888
        %934 = vmatprep.subr.bf16.mxu0 0
        %935 = vmatpush1.bf16.msra.mxu0 %v889
        %936 = vmatprep.subr.bf16.mxu0 0
        %937 = vmatpush1.bf16.msra.mxu0 %v890
        %938 = vmatprep.subr.bf16.mxu0 0
        %939 = vmatpush1.bf16.msra.mxu0 %v891
        %940 = vmatprep.mubr.bf16.mxu0 %v748
        %941 = vmatmul.mubr.bf16.gmra.mrb[0].mxu0 %v652
        %v942 = vpop.f32.mrb[0].mxu0
        %v943 = vadd.f32 0.0, %v942
        %v944 = vpop.f32.mrb[0].mxu0
        %v945 = vpop.f32.mrb[0].mxu0
        %v946 = vadd.f32 0.0, %v945
        %v947 = vpop.f32.mrb[0].mxu0
        %948 = vmatprep.mubr.bf16.mxu0 %v749
        %949 = vmatmul.mubr.bf16.gmra.mrb[0].mxu0 %v653
        %v950 = vpop.f32.mrb[0].mxu0
        %v951 = vadd.f32 0.0, %v950
        %v952 = vpop.f32.mrb[0].mxu0
        %v953 = vpop.f32.mrb[0].mxu0
        %v954 = vadd.f32 0.0, %v953
        %v955 = vpop.f32.mrb[0].mxu0
        %956 = vmatprep.mubr.bf16.mxu0 %v750
        %957 = vmatmul.mubr.bf16.gmra.mrb[0].mxu0 %v654
        %v958 = vpop.f32.mrb[0].mxu0
        %v959 = vadd.f32 0.0, %v958
        %v960 = vpop.f32.mrb[0].mxu0
        %v961 = vpop.f32.mrb[0].mxu0
        %v962 = vadd.f32 0.0, %v961
        %v963 = vpop.f32.mrb[0].mxu0
        %964 = vmatprep.mubr.bf16.mxu0 %v751
        %965 = vmatmul.mubr.bf16.gmra.mrb[0].mxu0 %v655
        %v966 = vpop.f32.mrb[0].mxu0
        %v967 = vadd.f32 0.0, %v966
        %v968 = vpop.f32.mrb[0].mxu0
        %v969 = vpop.f32.mrb[0].mxu0
        %v970 = vadd.f32 0.0, %v969
        %v971 = vpop.f32.mrb[0].mxu0
        %972 = vmatprep.mubr.bf16.mxu0 %v752
        %973 = vmatmul.mubr.bf16.gmra.mrb[0].mxu0 %v656
        %v974 = vpop.f32.mrb[0].mxu0
        %v975 = vadd.f32 0.0, %v974
        %v976 = vpop.f32.mrb[0].mxu0
        %v977 = vpop.f32.mrb[0].mxu0
        %v978 = vadd.f32 0.0, %v977
        %v979 = vpop.f32.mrb[0].mxu0
        %980 = vmatprep.mubr.bf16.mxu0 %v753
        %981 = vmatmul.mubr.bf16.gmra.mrb[0].mxu0 %v657
        %v982 = vpop.f32.mrb[0].mxu0
        %v983 = vadd.f32 0.0, %v982
        %v984 = vpop.f32.mrb[0].mxu0
        %v985 = vpop.f32.mrb[0].mxu0
        %v986 = vadd.f32 0.0, %v985
        %v987 = vpop.f32.mrb[0].mxu0
        %988 = vmatprep.mubr.bf16.mxu0 %v754
        %989 = vmatmul.mubr.bf16.gmra.mrb[0].mxu0 %v658
        %v990 = vpop.f32.mrb[0].mxu0
        %v991 = vadd.f32 0.0, %v990
        %v992 = vpop.f32.mrb[0].mxu0
        %v993 = vpop.f32.mrb[0].mxu0
        %v994 = vadd.f32 0.0, %v993
        %v995 = vpop.f32.mrb[0].mxu0
        %996 = vmatprep.mubr.bf16.mxu0 %v755
        %997 = vmatmul.mubr.bf16.gmra.mrb[0].mxu0 %v659
        %v998 = vpop.f32.mrb[0].mxu0
        %v999 = vadd.f32 0.0, %v998
        %v1000 = vpop.f32.mrb[0].mxu0
        %v1001 = vpop.f32.mrb[0].mxu0
        %v1002 = vadd.f32 0.0, %v1001
        %v1003 = vpop.f32.mrb[0].mxu0
        %1004 = vmatprep.mubr.bf16.mxu0 %v756
        %1005 = vmatmul.mubr.bf16.gmra.mrb[0].mxu0 %v660
        %v1006 = vpop.f32.mrb[0].mxu0
        %v1007 = vadd.f32 0.0, %v1006
        %v1008 = vpop.f32.mrb[0].mxu0
        %v1009 = vpop.f32.mrb[0].mxu0
        %v1010 = vadd.f32 0.0, %v1009
        %v1011 = vpop.f32.mrb[0].mxu0
        %1012 = vmatprep.mubr.bf16.mxu0 %v757
        %1013 = vmatmul.mubr.bf16.gmra.mrb[0].mxu0 %v661
        %v1014 = vpop.f32.mrb[0].mxu0
        %v1015 = vadd.f32 0.0, %v1014
        %v1016 = vpop.f32.mrb[0].mxu0
        %v1017 = vpop.f32.mrb[0].mxu0
        %v1018 = vadd.f32 0.0, %v1017
        %v1019 = vpop.f32.mrb[0].mxu0
        %1020 = vmatprep.mubr.bf16.mxu0 %v758
        %1021 = vmatmul.mubr.bf16.gmra.mrb[0].mxu0 %v662
        %v1022 = vpop.f32.mrb[0].mxu0
        %v1023 = vadd.f32 0.0, %v1022
        %v1024 = vpop.f32.mrb[0].mxu0
        %v1025 = vpop.f32.mrb[0].mxu0
        %v1026 = vadd.f32 0.0, %v1025
        %v1027 = vpop.f32.mrb[0].mxu0
        %1028 = vmatprep.mubr.bf16.mxu0 %v759
        %1029 = vmatmul.mubr.bf16.gmra.mrb[0].mxu0 %v663
        %v1030 = vpop.f32.mrb[0].mxu0
        %v1031 = vadd.f32 0.0, %v1030
        %v1032 = vpop.f32.mrb[0].mxu0
        %v1033 = vpop.f32.mrb[0].mxu0
        %v1034 = vadd.f32 0.0, %v1033
        %v1035 = vpop.f32.mrb[0].mxu0
        %1036 = vmatprep.mubr.bf16.mxu0 %v760
        %1037 = vmatmul.mubr.bf16.gmra.mrb[0].mxu0 %v664
        %v1038 = vpop.f32.mrb[0].mxu0
        %v1039 = vadd.f32 0.0, %v1038
        %v1040 = vpop.f32.mrb[0].mxu0
        %v1041 = vpop.f32.mrb[0].mxu0
        %v1042 = vadd.f32 0.0, %v1041
        %v1043 = vpop.f32.mrb[0].mxu0
        %1044 = vmatprep.mubr.bf16.mxu0 %v761
        %1045 = vmatmul.mubr.bf16.gmra.mrb[0].mxu0 %v665
        %v1046 = vpop.f32.mrb[0].mxu0
        %v1047 = vadd.f32 0.0, %v1046
        %v1048 = vpop.f32.mrb[0].mxu0
        %v1049 = vpop.f32.mrb[0].mxu0
        %v1050 = vadd.f32 0.0, %v1049
        %v1051 = vpop.f32.mrb[0].mxu0
        %1052 = vmatprep.mubr.bf16.mxu0 %v762
        %1053 = vmatmul.mubr.bf16.gmra.mrb[0].mxu0 %v666
        %v1054 = vpop.f32.mrb[0].mxu0
        %v1055 = vadd.f32 0.0, %v1054
        %v1056 = vpop.f32.mrb[0].mxu0
        %v1057 = vpop.f32.mrb[0].mxu0
        %v1058 = vadd.f32 0.0, %v1057
        %v1059 = vpop.f32.mrb[0].mxu0
        %1060 = vmatprep.mubr.bf16.mxu0 %v763
        %1061 = vmatmul.mubr.bf16.gmra.mrb[0].mxu0 %v667
        %v1062 = vpop.f32.mrb[0].mxu0
        %v1063 = vadd.f32 0.0, %v1062
        %v1064 = vpop.f32.mrb[0].mxu0
        %v1065 = vpop.f32.mrb[0].mxu0
        %v1066 = vadd.f32 0.0, %v1065
        %v1067 = vpop.f32.mrb[0].mxu0
        %1068 = vdwg.mxu0
        %v1101 = vunpack.c.l.b16 %v484
        %v1102 = vunpack.c.l.b16 %v485
        %v1103 = vunpack.c.l.b16 %v486
        %v1104 = vunpack.c.l.b16 %v487
        %v1105 = vunpack.c.l.b16 %v488
        %v1106 = vunpack.c.l.b16 %v489
        %v1107 = vunpack.c.l.b16 %v490
        %v1108 = vunpack.c.l.b16 %v491
        %v1109 = vunpack.c.l.b16 %v492
        %v1110 = vunpack.c.l.b16 %v493
        %v1111 = vunpack.c.l.b16 %v494
        %v1112 = vunpack.c.l.b16 %v495
        %v1113 = vunpack.c.l.b16 %v496
        %v1114 = vunpack.c.l.b16 %v497
        %v1115 = vunpack.c.l.b16 %v498
        %v1116 = vunpack.c.l.b16 %v499
        %v1117 = vunpack.c.l.b16 %v500
        %v1118 = vunpack.c.l.b16 %v501
        %v1119 = vunpack.c.l.b16 %v502
        %v1120 = vunpack.c.l.b16 %v503
        %v1121 = vunpack.c.l.b16 %v504
        %v1122 = vunpack.c.l.b16 %v505
        %v1123 = vunpack.c.l.b16 %v506
        %v1124 = vunpack.c.l.b16 %v507
        %v1125 = vunpack.c.l.b16 %v508
        %v1126 = vunpack.c.l.b16 %v509
        %v1127 = vunpack.c.l.b16 %v510
        %v1128 = vunpack.c.l.b16 %v511
        %v1129 = vunpack.c.l.b16 %v512
        %v1130 = vunpack.c.l.b16 %v513
        %v1131 = vunpack.c.l.b16 %v514
        %v1132 = vunpack.c.l.b16 %v515
        %v1133 = vpack.c.b16 %v1102, %v1101
        %v1134 = vpack.c.b16 %v1104, %v1103
        %v1135 = vpack.c.b16 %v1106, %v1105
        %v1136 = vpack.c.b16 %v1108, %v1107
        %v1137 = vpack.c.b16 %v1110, %v1109
        %v1138 = vpack.c.b16 %v1112, %v1111
        %v1139 = vpack.c.b16 %v1114, %v1113
        %v1140 = vpack.c.b16 %v1116, %v1115
        %v1141 = vpack.c.b16 %v1118, %v1117
        %v1142 = vpack.c.b16 %v1120, %v1119
        %v1143 = vpack.c.b16 %v1122, %v1121
        %v1144 = vpack.c.b16 %v1124, %v1123
        %v1145 = vpack.c.b16 %v1126, %v1125
        %v1146 = vpack.c.b16 %v1128, %v1127
        %v1147 = vpack.c.b16 %v1130, %v1129
        %v1148 = vpack.c.b16 %v1132, %v1131
        %1165 = vmatprep.subr.bf16.mxu0 0
        %1166 = vmatpush1.bf16.msra.mxu0 %v1133
        %1167 = vmatprep.subr.bf16.mxu0 0
        %1168 = vmatpush1.bf16.msra.mxu0 %v1134
        %1169 = vmatprep.subr.bf16.mxu0 0
        %1170 = vmatpush1.bf16.msra.mxu0 %v1135
        %1171 = vmatprep.subr.bf16.mxu0 0
        %1172 = vmatpush1.bf16.msra.mxu0 %v1136
        %1173 = vmatprep.subr.bf16.mxu0 0
        %1174 = vmatpush1.bf16.msra.mxu0 %v1137
        %1175 = vmatprep.subr.bf16.mxu0 0
        %1176 = vmatpush1.bf16.msra.mxu0 %v1138
        %1177 = vmatprep.subr.bf16.mxu0 0
        %1178 = vmatpush1.bf16.msra.mxu0 %v1139
        %1179 = vmatprep.subr.bf16.mxu0 0
        %1180 = vmatpush1.bf16.msra.mxu0 %v1140
        %1181 = vmatprep.subr.bf16.mxu0 0
        %1182 = vmatpush1.bf16.msra.mxu0 %v1141
        %1183 = vmatprep.subr.bf16.mxu0 0
        %1184 = vmatpush1.bf16.msra.mxu0 %v1142
        %1185 = vmatprep.subr.bf16.mxu0 0
        %1186 = vmatpush1.bf16.msra.mxu0 %v1143
        %1187 = vmatprep.subr.bf16.mxu0 0
        %1188 = vmatpush1.bf16.msra.mxu0 %v1144
        %1189 = vmatprep.subr.bf16.mxu0 0
        %1190 = vmatpush1.bf16.msra.mxu0 %v1145
        %1191 = vmatprep.subr.bf16.mxu0 0
        %1192 = vmatpush1.bf16.msra.mxu0 %v1146
        %1193 = vmatprep.subr.bf16.mxu0 0
        %1194 = vmatpush1.bf16.msra.mxu0 %v1147
        %1195 = vmatprep.subr.bf16.mxu0 0
        %1196 = vmatpush1.bf16.msra.mxu0 %v1148
        %1197 = vmatprep.mubr.bf16.mxu0 %v452
        %1198 = vmatmul.mubr.bf16.gmra.mrb[0].mxu0 %v356
        %v1199 = vpop.f32.mrb[0].mxu0
        %v1200 = vadd.f32 %v943, %v1199
        %v1201 = vpop.f32.mrb[0].mxu0
        %v1202 = vpop.f32.mrb[0].mxu0
        %v1203 = vadd.f32 %v946, %v1202
        %v1204 = vpop.f32.mrb[0].mxu0
        %1205 = vmatprep.mubr.bf16.mxu0 %v453
        %1206 = vmatmul.mubr.bf16.gmra.mrb[0].mxu0 %v357
        %v1207 = vpop.f32.mrb[0].mxu0
        %v1208 = vadd.f32 %v951, %v1207
        %v1209 = vpop.f32.mrb[0].mxu0
        %v1210 = vpop.f32.mrb[0].mxu0
        %v1211 = vadd.f32 %v954, %v1210
        %v1212 = vpop.f32.mrb[0].mxu0
        %1213 = vmatprep.mubr.bf16.mxu0 %v454
        %1214 = vmatmul.mubr.bf16.gmra.mrb[0].mxu0 %v358
        %v1215 = vpop.f32.mrb[0].mxu0
        %v1216 = vadd.f32 %v959, %v1215
        %v1217 = vpop.f32.mrb[0].mxu0
        %v1218 = vpop.f32.mrb[0].mxu0
        %v1219 = vadd.f32 %v962, %v1218
        %v1220 = vpop.f32.mrb[0].mxu0
        %1221 = vmatprep.mubr.bf16.mxu0 %v455
        %1222 = vmatmul.mubr.bf16.gmra.mrb[0].mxu0 %v359
        %v1223 = vpop.f32.mrb[0].mxu0
        %v1224 = vadd.f32 %v967, %v1223
        %v1225 = vpop.f32.mrb[0].mxu0
        %v1226 = vpop.f32.mrb[0].mxu0
        %v1227 = vadd.f32 %v970, %v1226
        %v1228 = vpop.f32.mrb[0].mxu0
        %1229 = vmatprep.mubr.bf16.mxu0 %v456
        %1230 = vmatmul.mubr.bf16.gmra.mrb[0].mxu0 %v360
        %v1231 = vpop.f32.mrb[0].mxu0
        %v1232 = vadd.f32 %v975, %v1231
        %v1233 = vpop.f32.mrb[0].mxu0
        %v1234 = vpop.f32.mrb[0].mxu0
        %v1235 = vadd.f32 %v978, %v1234
        %v1236 = vpop.f32.mrb[0].mxu0
        %1237 = vmatprep.mubr.bf16.mxu0 %v457
        %1238 = vmatmul.mubr.bf16.gmra.mrb[0].mxu0 %v361
        %v1239 = vpop.f32.mrb[0].mxu0
        %v1240 = vadd.f32 %v983, %v1239
        %v1241 = vpop.f32.mrb[0].mxu0
        %v1242 = vpop.f32.mrb[0].mxu0
        %v1243 = vadd.f32 %v986, %v1242
        %v1244 = vpop.f32.mrb[0].mxu0
        %1245 = vmatprep.mubr.bf16.mxu0 %v458
        %1246 = vmatmul.mubr.bf16.gmra.mrb[0].mxu0 %v362
        %v1247 = vpop.f32.mrb[0].mxu0
        %v1248 = vadd.f32 %v991, %v1247
        %v1249 = vpop.f32.mrb[0].mxu0
        %v1250 = vpop.f32.mrb[0].mxu0
        %v1251 = vadd.f32 %v994, %v1250
        %v1252 = vpop.f32.mrb[0].mxu0
        %1253 = vmatprep.mubr.bf16.mxu0 %v459
        %1254 = vmatmul.mubr.bf16.gmra.mrb[0].mxu0 %v363
        %v1255 = vpop.f32.mrb[0].mxu0
        %v1256 = vadd.f32 %v999, %v1255
        %v1257 = vpop.f32.mrb[0].mxu0
        %v1258 = vpop.f32.mrb[0].mxu0
        %v1259 = vadd.f32 %v1002, %v1258
        %v1260 = vpop.f32.mrb[0].mxu0
        %1261 = vmatprep.mubr.bf16.mxu0 %v460
        %1262 = vmatmul.mubr.bf16.gmra.mrb[0].mxu0 %v364
        %v1263 = vpop.f32.mrb[0].mxu0
        %v1264 = vadd.f32 %v1007, %v1263
        %v1265 = vpop.f32.mrb[0].mxu0
        %v1266 = vpop.f32.mrb[0].mxu0
        %v1267 = vadd.f32 %v1010, %v1266
        %v1268 = vpop.f32.mrb[0].mxu0
        %1269 = vmatprep.mubr.bf16.mxu0 %v461
        %1270 = vmatmul.mubr.bf16.gmra.mrb[0].mxu0 %v365
        %v1271 = vpop.f32.mrb[0].mxu0
        %v1272 = vadd.f32 %v1015, %v1271
        %v1273 = vpop.f32.mrb[0].mxu0
        %v1274 = vpop.f32.mrb[0].mxu0
        %v1275 = vadd.f32 %v1018, %v1274
        %v1276 = vpop.f32.mrb[0].mxu0
        %1277 = vmatprep.mubr.bf16.mxu0 %v462
        %1278 = vmatmul.mubr.bf16.gmra.mrb[0].mxu0 %v366
        %v1279 = vpop.f32.mrb[0].mxu0
        %v1280 = vadd.f32 %v1023, %v1279
        %v1281 = vpop.f32.mrb[0].mxu0
        %v1282 = vpop.f32.mrb[0].mxu0
        %v1283 = vadd.f32 %v1026, %v1282
        %v1284 = vpop.f32.mrb[0].mxu0
        %1285 = vmatprep.mubr.bf16.mxu0 %v463
        %1286 = vmatmul.mubr.bf16.gmra.mrb[0].mxu0 %v367
        %v1287 = vpop.f32.mrb[0].mxu0
        %v1288 = vadd.f32 %v1031, %v1287
        %v1289 = vpop.f32.mrb[0].mxu0
        %v1290 = vpop.f32.mrb[0].mxu0
        %v1291 = vadd.f32 %v1034, %v1290
        %v1292 = vpop.f32.mrb[0].mxu0
        %1293 = vmatprep.mubr.bf16.mxu0 %v464
        %1294 = vmatmul.mubr.bf16.gmra.mrb[0].mxu0 %v368
        %v1295 = vpop.f32.mrb[0].mxu0
        %v1296 = vadd.f32 %v1039, %v1295
        %v1297 = vpop.f32.mrb[0].mxu0
        %v1298 = vpop.f32.mrb[0].mxu0
        %v1299 = vadd.f32 %v1042, %v1298
        %v1300 = vpop.f32.mrb[0].mxu0
        %1301 = vmatprep.mubr.bf16.mxu0 %v465
        %1302 = vmatmul.mubr.bf16.gmra.mrb[0].mxu0 %v369
        %v1303 = vpop.f32.mrb[0].mxu0
        %v1304 = vadd.f32 %v1047, %v1303
        %v1305 = vpop.f32.mrb[0].mxu0
        %v1306 = vpop.f32.mrb[0].mxu0
        %v1307 = vadd.f32 %v1050, %v1306
        %v1308 = vpop.f32.mrb[0].mxu0
        %1309 = vmatprep.mubr.bf16.mxu0 %v466
        %1310 = vmatmul.mubr.bf16.gmra.mrb[0].mxu0 %v370
        %v1311 = vpop.f32.mrb[0].mxu0
        %v1312 = vadd.f32 %v1055, %v1311
        %v1313 = vpop.f32.mrb[0].mxu0
        %v1314 = vpop.f32.mrb[0].mxu0
        %v1315 = vadd.f32 %v1058, %v1314
        %v1316 = vpop.f32.mrb[0].mxu0
        %1317 = vmatprep.mubr.bf16.mxu0 %v467
        %1318 = vmatmul.mubr.bf16.gmra.mrb[0].mxu0 %v371
        %v1319 = vpop.f32.mrb[0].mxu0
        %v1320 = vadd.f32 %v1063, %v1319
        %v1321 = vpop.f32.mrb[0].mxu0
        %v1322 = vpop.f32.mrb[0].mxu0
        %v1323 = vadd.f32 %v1066, %v1322
        %v1324 = vpop.f32.mrb[0].mxu0
        %1325 = vdwg.mxu0
        %v1326 = vld [vmem:[%s2] sm:$0x1]
        %v1328 = vlaneseq
        %v1329 = vshrl.u32 %v1328, 7
        %v1330 = vsub.s32 0, %v1329
        %v1331 = vrot.slane %v1326, %v1330
        %v1333 = vadd.f32 %v1200, %v1331
        %v1334 = vadd.f32 %v1203, %v1331
        %v1335 = vadd.f32 %v1208, %v1331
        %v1336 = vadd.f32 %v1211, %v1331
        %v1337 = vadd.f32 %v1216, %v1331
        %v1338 = vadd.f32 %v1219, %v1331
        %v1339 = vadd.f32 %v1224, %v1331
        %v1340 = vadd.f32 %v1227, %v1331
        %v1341 = vadd.f32 %v1232, %v1331
        %v1342 = vadd.f32 %v1235, %v1331
        %v1343 = vadd.f32 %v1240, %v1331
        %v1344 = vadd.f32 %v1243, %v1331
        %v1345 = vadd.f32 %v1248, %v1331
        %v1346 = vadd.f32 %v1251, %v1331
        %v1347 = vadd.f32 %v1256, %v1331
        %v1348 = vadd.f32 %v1259, %v1331
        %v1349 = vadd.f32 %v1264, %v1331
        %v1350 = vadd.f32 %v1267, %v1331
        %v1351 = vadd.f32 %v1272, %v1331
        %v1352 = vadd.f32 %v1275, %v1331
        %v1353 = vadd.f32 %v1280, %v1331
        %v1354 = vadd.f32 %v1283, %v1331
        %v1355 = vadd.f32 %v1288, %v1331
        %v1356 = vadd.f32 %v1291, %v1331
        %v1357 = vadd.f32 %v1296, %v1331
        %v1358 = vadd.f32 %v1299, %v1331
        %v1359 = vadd.f32 %v1304, %v1331
        %v1360 = vadd.f32 %v1307, %v1331
        %v1361 = vadd.f32 %v1312, %v1331
        %v1362 = vadd.f32 %v1315, %v1331
        %v1363 = vadd.f32 %v1320, %v1331
        %v1364 = vadd.f32 %v1323, %v1331
        %v1365 = vmax.f32 %v1333, 0.0
        %v1366 = vmax.f32 %v1334, 0.0
        %v1367 = vmax.f32 %v1335, 0.0
        %v1368 = vmax.f32 %v1336, 0.0
        %v1369 = vmax.f32 %v1337, 0.0
        %v1370 = vmax.f32 %v1338, 0.0
        %v1371 = vmax.f32 %v1339, 0.0
        %v1372 = vmax.f32 %v1340, 0.0
        %v1373 = vmax.f32 %v1341, 0.0
        %v1374 = vmax.f32 %v1342, 0.0
        %v1375 = vmax.f32 %v1343, 0.0
        %v1376 = vmax.f32 %v1344, 0.0
        %v1377 = vmax.f32 %v1345, 0.0
        %v1378 = vmax.f32 %v1346, 0.0
        %v1379 = vmax.f32 %v1347, 0.0
        %v1380 = vmax.f32 %v1348, 0.0
        %v1381 = vmax.f32 %v1349, 0.0
        %v1382 = vmax.f32 %v1350, 0.0
        %v1383 = vmax.f32 %v1351, 0.0
        %v1384 = vmax.f32 %v1352, 0.0
        %v1385 = vmax.f32 %v1353, 0.0
        %v1386 = vmax.f32 %v1354, 0.0
        %v1387 = vmax.f32 %v1355, 0.0
        %v1388 = vmax.f32 %v1356, 0.0
        %v1389 = vmax.f32 %v1357, 0.0
        %v1390 = vmax.f32 %v1358, 0.0
        %v1391 = vmax.f32 %v1359, 0.0
        %v1392 = vmax.f32 %v1360, 0.0
        %v1393 = vmax.f32 %v1361, 0.0
        %v1394 = vmax.f32 %v1362, 0.0
        %v1395 = vmax.f32 %v1363, 0.0
        %v1396 = vmax.f32 %v1364, 0.0
        %v1397 = vpack.c.bf16 %v1366, %v1365
        %v1398 = vpack.c.bf16 %v1368, %v1367
        %v1399 = vpack.c.bf16 %v1370, %v1369
        %v1400 = vpack.c.bf16 %v1372, %v1371
        %v1401 = vpack.c.bf16 %v1374, %v1373
        %v1402 = vpack.c.bf16 %v1376, %v1375
        %v1403 = vpack.c.bf16 %v1378, %v1377
        %v1404 = vpack.c.bf16 %v1380, %v1379
        %v1405 = vpack.c.bf16 %v1382, %v1381
        %v1406 = vpack.c.bf16 %v1384, %v1383
        %v1407 = vpack.c.bf16 %v1386, %v1385
        %v1408 = vpack.c.bf16 %v1388, %v1387
        %v1409 = vpack.c.bf16 %v1390, %v1389
        %v1410 = vpack.c.bf16 %v1392, %v1391
        %v1411 = vpack.c.bf16 %v1394, %v1393
        %v1412 = vpack.c.bf16 %v1396, %v1395
        %v1429 = vunpack.c.l.b16 %v1397
        %v1430 = vunpack.c.h.b16 %v1397
        %v1431 = vunpack.c.l.b16 %v1398
        %v1432 = vunpack.c.h.b16 %v1398
        %v1433 = vunpack.c.l.b16 %v1399
        %v1434 = vunpack.c.h.b16 %v1399
        %v1435 = vunpack.c.l.b16 %v1400
        %v1436 = vunpack.c.h.b16 %v1400
        %v1437 = vunpack.c.l.b16 %v1401
        %v1438 = vunpack.c.h.b16 %v1401
        %v1439 = vunpack.c.l.b16 %v1402
        %v1440 = vunpack.c.h.b16 %v1402
        %v1441 = vunpack.c.l.b16 %v1403
        %v1442 = vunpack.c.h.b16 %v1403
        %v1443 = vunpack.c.l.b16 %v1404
        %v1444 = vunpack.c.h.b16 %v1404
        %v1445 = vunpack.c.l.b16 %v1405
        %v1446 = vunpack.c.h.b16 %v1405
        %v1447 = vunpack.c.l.b16 %v1406
        %v1448 = vunpack.c.h.b16 %v1406
        %v1449 = vunpack.c.l.b16 %v1407
        %v1450 = vunpack.c.h.b16 %v1407
        %v1451 = vunpack.c.l.b16 %v1408
        %v1452 = vunpack.c.h.b16 %v1408
        %v1453 = vunpack.c.l.b16 %v1409
        %v1454 = vunpack.c.h.b16 %v1409
        %v1455 = vunpack.c.l.b16 %v1410
        %v1456 = vunpack.c.h.b16 %v1410
        %v1457 = vunpack.c.l.b16 %v1411
        %v1458 = vunpack.c.h.b16 %v1411
        %v1459 = vunpack.c.l.b16 %v1412
        %v1460 = vunpack.c.h.b16 %v1412
        %v1461 = vpack.c.b16 %v1429, %v1429
        %v1462 = vpack.c.b16 %v1430, %v1430
        %v1463 = vpack.c.b16 %v1431, %v1431
        %v1464 = vpack.c.b16 %v1432, %v1432
        %v1465 = vpack.c.b16 %v1433, %v1433
        %v1466 = vpack.c.b16 %v1434, %v1434
        %v1467 = vpack.c.b16 %v1435, %v1435
        %v1468 = vpack.c.b16 %v1436, %v1436
        %v1469 = vpack.c.b16 %v1437, %v1437
        %v1470 = vpack.c.b16 %v1438, %v1438
        %v1471 = vpack.c.b16 %v1439, %v1439
        %v1472 = vpack.c.b16 %v1440, %v1440
        %v1473 = vpack.c.b16 %v1441, %v1441
        %v1474 = vpack.c.b16 %v1442, %v1442
        %v1475 = vpack.c.b16 %v1443, %v1443
        %v1476 = vpack.c.b16 %v1444, %v1444
        %v1477 = vpack.c.b16 %v1445, %v1445
        %v1478 = vpack.c.b16 %v1446, %v1446
        %v1479 = vpack.c.b16 %v1447, %v1447
        %v1480 = vpack.c.b16 %v1448, %v1448
        %v1481 = vpack.c.b16 %v1449, %v1449
        %v1482 = vpack.c.b16 %v1450, %v1450
        %v1483 = vpack.c.b16 %v1451, %v1451
        %v1484 = vpack.c.b16 %v1452, %v1452
        %v1485 = vpack.c.b16 %v1453, %v1453
        %v1486 = vpack.c.b16 %v1454, %v1454
        %v1487 = vpack.c.b16 %v1455, %v1455
        %v1488 = vpack.c.b16 %v1456, %v1456
        %v1489 = vpack.c.b16 %v1457, %v1457
        %v1490 = vpack.c.b16 %v1458, %v1458
        %v1491 = vpack.c.b16 %v1459, %v1459
        %v1492 = vpack.c.b16 %v1460, %v1460
        %1525 = vst [vmem:[%s217] sm:$0xf] %v1461
        %1526 = vst [vmem:[%s217 + $0x4] sm:$0xf] %v1462
        %1527 = vst [vmem:[%s217 + $0x8] sm:$0xf] %v1463
        %1528 = vst [vmem:[%s217 + $0xc] sm:$0xf] %v1464
        %1529 = vst [vmem:[%s217 + $0x10] sm:$0xf] %v1465
        %1530 = vst [vmem:[%s217 + $0x14] sm:$0xf] %v1466
        %1531 = vst [vmem:[%s217 + $0x18] sm:$0xf] %v1467
        %1532 = vst [vmem:[%s217 + $0x1c] sm:$0xf] %v1468
        %1533 = vst [vmem:[%s217 + $0x20] sm:$0xf] %v1469
        %1534 = vst [vmem:[%s217 + $0x24] sm:$0xf] %v1470
        %1535 = vst [vmem:[%s217 + $0x28] sm:$0xf] %v1471
        %1536 = vst [vmem:[%s217 + $0x2c] sm:$0xf] %v1472
        %1537 = vst [vmem:[%s217 + $0x30] sm:$0xf] %v1473
        %1538 = vst [vmem:[%s217 + $0x34] sm:$0xf] %v1474
        %1539 = vst [vmem:[%s217 + $0x38] sm:$0xf] %v1475
        %1540 = vst [vmem:[%s217 + $0x3c] sm:$0xf] %v1476
        %1541 = vst [vmem:[%s217 + $0x40] sm:$0xf] %v1477
        %1542 = vst [vmem:[%s217 + $0x44] sm:$0xf] %v1478
        %1543 = vst [vmem:[%s217 + $0x48] sm:$0xf] %v1479
        %1544 = vst [vmem:[%s217 + $0x4c] sm:$0xf] %v1480
        %1545 = vst [vmem:[%s217 + $0x50] sm:$0xf] %v1481
        %1546 = vst [vmem:[%s217 + $0x54] sm:$0xf] %v1482
        %1547 = vst [vmem:[%s217 + $0x58] sm:$0xf] %v1483
        %1548 = vst [vmem:[%s217 + $0x5c] sm:$0xf] %v1484
        %1549 = vst [vmem:[%s217 + $0x60] sm:$0xf] %v1485
        %1550 = vst [vmem:[%s217 + $0x64] sm:$0xf] %v1486
        %1551 = vst [vmem:[%s217 + $0x68] sm:$0xf] %v1487
        %1552 = vst [vmem:[%s217 + $0x6c] sm:$0xf] %v1488
        %1553 = vst [vmem:[%s217 + $0x70] sm:$0xf] %v1489
        %1554 = vst [vmem:[%s217 + $0x74] sm:$0xf] %v1490
        %1555 = vst [vmem:[%s217 + $0x78] sm:$0xf] %v1491
        %1556 = vst [vmem:[%s217 + $0x7c] sm:$0xf] %v1492
        %s1557 = sand.u32 %s111, 1
        %s1558 = scalar_lea.sflag [#allocation4], %s1557
        %s1559 = sand.u32 %s111, 1
        %s1560 = smul.addr %s1559, 128
        %s1561 = scalar_lea.vmem [#allocation7], %s1560
        // Predicated region
        $region41: #{tpu_custom_call.1} parent=31 // pred_check
          %p1562 = pneg %p121
        $region42: #{tpu_custom_call.1} parent=31 // pred_check_branch
          %1564 = sbr.rel (%p1562) target = $region44
        $region43: #{tpu_custom_call.1} parent=31 // pred_region
          %s1565 = smul.u32 32, %s26
          %s1567 = ssub.s32 2048, 2048
          %1568 = vsyncadd %s1558, %s1567
          %s1569 = smul.addr %s25, 128
          %s1570 = sadd.s32 %s1565, %s1569
          %s1571 = smul.addr %s1570, 64
          %s1572 = scalar_lea.hbm %s3, %s1571
          %s1573 = sshll.u32 %s1561, 4
          %s1574 = int_to_ptr.vmem [resolvable:$true] %s1573
          %1579 = dma.vmem_to_hbm [thread:$0]  %s1574, 2048, %s1572, %s1558, 64, 64, 4
        $region44: #{tpu_custom_call.1} parent=31 // pred_fallthru
          _
      $region32: #{tpu_custom_call.1} parent=5 // pred_fallthru
        _
      %p1580 = scmp.le.s32.totalorder 2, %s16
      // Predicated region
      $region45: #{tpu_custom_call.1} parent=5 // pred_check
        %p1581 = pneg %p1580
      $region46: #{tpu_custom_call.1} parent=5 // pred_check_branch
        %1583 = sbr.rel (%p1581) target = $region48
      $region47: #{tpu_custom_call.1} parent=5 // pred_region
        %s1584 = ssub.s32 %s16, 2
        // Predicated region
        $region49: #{tpu_custom_call.1} parent=47 // pred_check
          %p1585 = pneg %p127
        $region50: #{tpu_custom_call.1} parent=47 // pred_check_branch
          %1587 = sbr.rel (%p1585) target = $region52
        $region51: #{tpu_custom_call.1} parent=47 // pred_region
          %s1588 = sand.u32 %s112, 1
          %s1589 = scalar_lea.sflag [#allocation4], %s1588
          %s1590 = sand.u32 %s112, 1
          %s1591 = smul.addr %s1590, 128
          %s1592 = scalar_lea.vmem [#allocation7], %s1591
          %1593 = dma.done %s1589, 2048
        $region52: #{tpu_custom_call.1} parent=47 // pred_fallthru
          _
      $region48: #{tpu_custom_call.1} parent=5 // pred_fallthru
        _
    $region6: #{tpu_custom_call.1} parent=1 // loop_footer
      %s20 = sadd.s32 1, %s16
    $region7: #{tpu_custom_call.1} parent=1 // loop_footer_branch
      %15 = sbr.rel target = $region3
    $region8: #{tpu_custom_call.1} parent=1 // loop_exit
      _
    %1594 = vsyncpa [#allocation3], 1
    %s1595 = scalar_lea.sflag [#allocation3], 1
    %1596 = vsyncpa %s1595, 1
    %1597 = vsyncpa [#allocation6], 1
    %1598 = vsyncpa [#allocation4], 1
    %s1599 = scalar_lea.sflag [#allocation4], 1
    %1600 = vsyncpa %s1599, 1

</llo_original>
